<compile_context>
chip_gen: v6e
topology: v6e:2x2x1
jax: 0.10.0
libtpu: 0.0.40
codegen_flags: <defaults>
</compile_context>

<pallas_src>
import functools

import jax
import jax.numpy as jnp
from jax.experimental import pallas as pl
from jax.experimental.pallas import tpu as pltpu


def _round_up(x, m):
    return (x + m - 1) // m * m


# ----------------------------------------------------------------------------
# Fused kernel: conv3x3+BN+ReLU -> conv3x3+BN+ReLU for one image.
#
# Full-width trick: for flattened output row p (= h*W + w) the tap (dh, dw)
# contribution is x[p + dh*W + dw] @ W[dh, dw].  Building the 9-tap channel
# concat once turns each conv into a single matmul.  Columns w >= W-2 of the
# conv1 full-width result (and w >= W-4 of conv2's) are junk — they mix
# adjacent image rows — but they stay finite after the shift+ReLU and are never
# read by valid downstream taps (valid conv2 outputs only read y1 rows
# < (H-2)*W and columns w+dw <= W-3 < W-2); the wrapper crops them.
# ----------------------------------------------------------------------------
def _upconv_block_kernel(x_ref, w1_ref, s1_ref, w2_ref, s2_ref, o_ref,
                         *, W, M1P, M2):
    x = x_ref[...]                                        # (HWpad, Cin) bf16
    Q1 = M1P + 2 * W                                      # rows of dw-merged matrix

    # ---- conv1 (BN1 scale folded into w1): one matmul, K = 9*Cin ----
    x3 = jnp.concatenate([x[d:d + Q1] for d in range(3)], axis=-1)            # dw merge
    x9 = jnp.concatenate([x3[d * W:d * W + M1P] for d in range(3)], axis=-1)  # dh merge
    y1 = jnp.dot(x9, w1_ref[...], preferred_element_type=jnp.float32)
    y1 = jnp.maximum(y1 + s1_ref[...], 0.0).astype(jnp.bfloat16)              # (M1P, mid)

    # ---- conv2 (BN2 scale folded into w2) on the VMEM-resident intermediate ----
    Q2 = M2 + 2 * W
    y3 = jnp.concatenate([y1[d:d + Q2] for d in range(3)], axis=-1)
    y9 = jnp.concatenate([y3[d * W:d * W + M2] for d in range(3)], axis=-1)
    z = jnp.dot(y9, w2_ref[...], preferred_element_type=jnp.float32)

    # Single lane-contiguous full-width store; width crop happens in the wrapper.
    o_ref[...] = jnp.maximum(z + s2_ref[...], 0.0).astype(o_ref.dtype)


# ----------------------------------------------------------------------------
# Parameter prep: fold inference BatchNorm + conv bias into (weights, shift).
# ----------------------------------------------------------------------------
def _fold_conv_bn(conv, bn, eps=1e-5):
    """Returns bf16 (9*cin, cout) weights (dh-major, then dw, then cin — the
    same order the kernel's im2col concat produces) with the BN scale folded
    in, plus an f32 (1, cout) shift (= beta + (bias - mean) * scale)."""
    gamma, beta, mean, var = bn
    s = gamma / jnp.sqrt(var + eps)
    w = jnp.transpose(conv["w"], (2, 3, 1, 0)) * s        # (kh, kw, cin, cout), scale folded
    kh, kw, cin, cout = w.shape
    w = w.reshape(kh * kw * cin, cout)
    shift = beta + (conv["b"] - mean) * s
    return w.astype(jnp.bfloat16), shift.reshape(1, -1).astype(jnp.float32)


def upconv_forward(params, x_nchw):
    """PyTorch-layout interface: (N, in_c, H, W) f32 -> (N, out_c, H-4, W-4) f32."""
    n, cin, h, w = x_nchw.shape
    mid = params["conv1"]["w"].shape[0]
    out_c = params["conv2"]["w"].shape[0]
    # The module's BatchNorm2d(out_c) after a conv producing in_c//2 channels is
    # only shape-consistent when out_c == in_c//2.
    assert mid == out_c, "upConv requires out_c == in_c // 2"
    assert h > 4 and w > 4 and w % 8 == 0, "demo kernel assumes W % 8 == 0 and H,W > 4"
    ho2, wo2 = h - 4, w - 4

    m2 = ho2 * w                                  # conv2 full-width rows
    m1p = _round_up((h - 2) * w + 2, 8)           # conv1 full-width rows (+halo), 8-aligned
    hw_pad = _round_up(m1p + 2 * w + 2, 8)        # padded flattened input rows, 8-aligned

    # NCHW -> NHWC -> flattened (N, HWpad, Cin) bf16 rows; extra zero rows keep
    # every shifted slab in bounds and sublane-aligned.
    x = jnp.transpose(x_nchw, (0, 2, 3, 1)).reshape(n, h * w, cin)
    x = jnp.pad(x, ((0, 0), (0, hw_pad - h * w), (0, 0))).astype(jnp.bfloat16)

    w1, s1 = _fold_conv_bn(params["conv1"], params["bn1"])
    w2, s2 = _fold_conv_bn(params["conv2"], params["bn2"])

    out_flat = pl.pallas_call(
        functools.partial(_upconv_block_kernel, W=w, M1P=m1p, M2=m2),
        out_shape=jax.ShapeDtypeStruct((n, m2, out_c), jnp.float32),
        grid_spec=pltpu.PrefetchScalarGridSpec(
            num_scalar_prefetch=0,
            grid=(n,),
            in_specs=[
                pl.BlockSpec((None, hw_pad, cin), lambda i: (i, 0, 0)),   # image (read once)
                pl.BlockSpec((9 * cin, mid), lambda i: (0, 0)),           # w1 (resident)
                pl.BlockSpec((1, mid), lambda i: (0, 0)),                 # shift1
                pl.BlockSpec((9 * mid, out_c), lambda i: (0, 0)),         # w2 (resident)
                pl.BlockSpec((1, out_c), lambda i: (0, 0)),               # shift2
            ],
            out_specs=pl.BlockSpec((None, m2, out_c), lambda i: (i, 0, 0)),
        ),
        compiler_params=pltpu.CompilerParams(dimension_semantics=("parallel",)),
    )(x, w1, s1, w2, s2)

    # Full-width -> valid-width crop + back to NCHW (cheap layout plumbing in XLA).
    out = out_flat.reshape(n, ho2, w, out_c)[:, :, :wo2, :]
    return jnp.transpose(out, (0, 3, 1, 2))


# ----------------------------------------------------------------------------
# Deterministic synthetic parameters and a pure-JAX f32 reference.
# ----------------------------------------------------------------------------
def init_params(key, in_c, out_c):
    mid = in_c // 2
    ks = iter(jax.random.split(key, 16))

    def conv_p(cout, cin):
        return {"w": 0.1 * jax.random.normal(next(ks), (cout, cin, 3, 3), jnp.float32),
                "b": 0.05 * jax.random.normal(next(ks), (cout,), jnp.float32)}

    def bn_p(c):
        return (1.0 + 0.05 * jax.random.normal(next(ks), (c,), jnp.float32),   # gamma
                0.05 * jax.random.normal(next(ks), (c,), jnp.float32),          # beta
                0.05 * jax.random.normal(next(ks), (c,), jnp.float32),          # running_mean
                1.0 + 0.1 * jnp.abs(jax.random.normal(next(ks), (c,), jnp.float32)))  # running_var

    return {"conv1": conv_p(mid, in_c), "bn1": bn_p(mid),
            "conv2": conv_p(out_c, mid), "bn2": bn_p(out_c)}


def _ref_forward(params, x_nchw, eps=1e-5):
    x = jnp.transpose(x_nchw, (0, 2, 3, 1)).astype(jnp.float32)

    def conv_bn_relu(x, conv, bn):
        w = jnp.transpose(conv["w"], (2, 3, 1, 0))               # HWIO
        y = jax.lax.conv_general_dilated(
            x, w, window_strides=(1, 1), padding="VALID",
            dimension_numbers=("NHWC", "HWIO", "NHWC")) + conv["b"]
        gamma, beta, mean, var = bn
        y = (y - mean) * (gamma / jnp.sqrt(var + eps)) + beta
        return jnp.maximum(y, 0.0)

    x = conv_bn_relu(x, params["conv1"], params["bn1"])
    x = conv_bn_relu(x, params["conv2"], params["bn2"])
    return jnp.transpose(x, (0, 3, 1, 2))


if __name__ == "__main__":
    # upConv(in_c=64, out_c=32): out_c == in_c // 2, the configuration under
    # which the reference module's first BatchNorm2d(out_c) is shape-consistent.
    IN_C, OUT_C = 64, 32
    B, H, W = 2, 16, 16

    key = jax.random.PRNGKey(0)
    kp, kx = jax.random.split(key)
    params = init_params(kp, IN_C, OUT_C)
    x = jax.random.normal(kx, (B, IN_C, H, W), jnp.float32)

    out = jax.jit(upconv_forward)(params, x)
    out = jax.block_until_ready(out)

    assert out.shape == (B, OUT_C, H - 4, W - 4), out.shape
    assert bool(jnp.all(jnp.isfinite(out)))

    # Correctness vs an XLA f32 reference (loose tolerance: bf16 weights/activations).
    ref = _ref_forward(params, x)
    rel = float(jnp.max(jnp.abs(out - ref)) / (jnp.max(jnp.abs(ref)) + 1e-6))
    assert rel < 0.08, f"relative error too high: {rel}"

    print("KERNEL_OK")
</pallas_src>

<mosaic_0001>
module attributes {stable_mosaic.version = 11 : i64} {
  func.func @_upconv_block_kernel(%arg0: i32, %arg1: memref<1x272x64xbf16, #tpu.memory_space<vmem>>, %arg2: memref<576x32xbf16, #tpu.memory_space<vmem>>, %arg3: memref<1x32xf32, #tpu.memory_space<vmem>>, %arg4: memref<288x32xbf16, #tpu.memory_space<vmem>>, %arg5: memref<1x32xf32, #tpu.memory_space<vmem>>, %arg6: memref<1x192x32xf32, #tpu.memory_space<vmem>>) attributes {dimension_semantics = [#tpu.dimension_semantics<parallel>], iteration_bounds = array<i64: 2>, scalar_prefetch = 0 : i64, scratch_operands = 0 : i64, tpu.core_type = #tpu.core_type<tc>, window_params = [{transform_indices = @transform_0, window_bounds = array<i64: 1, 272, 64>}, {pipeline_mode = #tpu.pipeline_mode<synchronous>, transform_indices = @transform_1, window_bounds = array<i64: 576, 32>}, {pipeline_mode = #tpu.pipeline_mode<synchronous>, transform_indices = @transform_2, window_bounds = array<i64: 1, 32>}, {pipeline_mode = #tpu.pipeline_mode<synchronous>, transform_indices = @transform_3, window_bounds = array<i64: 288, 32>}, {pipeline_mode = #tpu.pipeline_mode<synchronous>, transform_indices = @transform_4, window_bounds = array<i64: 1, 32>}, {transform_indices = @transform_5, window_bounds = array<i64: 1, 192, 32>}]} {
    %c0 = arith.constant 0 : index
    %c0_0 = arith.constant 0 : index
    %c0_1 = arith.constant 0 : index
    %0 = vector.load %arg1[%c0, %c0_0, %c0_1] : memref<1x272x64xbf16, #tpu.memory_space<vmem>>, vector<1x272x64xbf16>
    %1 = vector.shape_cast %0 : vector<1x272x64xbf16> to vector<272x64xbf16>
    %2 = vector.extract_strided_slice %1 {offsets = [0, 0], sizes = [264, 64], strides = [1, 1]} : vector<272x64xbf16> to vector<264x64xbf16>
    %3 = vector.extract_strided_slice %1 {offsets = [1, 0], sizes = [264, 64], strides = [1, 1]} : vector<272x64xbf16> to vector<264x64xbf16>
    %4 = vector.extract_strided_slice %1 {offsets = [2, 0], sizes = [264, 64], strides = [1, 1]} : vector<272x64xbf16> to vector<264x64xbf16>
    %5 = tpu.concatenate %2, %3, %4 in 1 : vector<264x64xbf16>, vector<264x64xbf16>, vector<264x64xbf16> -> vector<264x192xbf16>
    %6 = vector.extract_strided_slice %5 {offsets = [0, 0], sizes = [232, 192], strides = [1, 1]} : vector<264x192xbf16> to vector<232x192xbf16>
    %7 = vector.extract_strided_slice %5 {offsets = [16, 0], sizes = [232, 192], strides = [1, 1]} : vector<264x192xbf16> to vector<232x192xbf16>
    %8 = vector.extract_strided_slice %5 {offsets = [32, 0], sizes = [232, 192], strides = [1, 1]} : vector<264x192xbf16> to vector<232x192xbf16>
    %9 = tpu.concatenate %6, %7, %8 in 1 : vector<232x192xbf16>, vector<232x192xbf16>, vector<232x192xbf16> -> vector<232x576xbf16>
    %c0_2 = arith.constant 0 : index
    %c0_3 = arith.constant 0 : index
    %10 = vector.load %arg2[%c0_2, %c0_3] : memref<576x32xbf16, #tpu.memory_space<vmem>>, vector<576x32xbf16>
    %cst = arith.constant dense<0.000000e+00> : vector<232x32xf32>
    %11 = tpu.matmul %9, %10, %cst {dimension_numbers = #tpu.dot_dimension_numbers<[1], [0], [0], [1], [0, 0, 1, 1], [], []>} : vector<232x576xbf16>, vector<576x32xbf16>, vector<232x32xf32> -> vector<232x32xf32>
    %c0_4 = arith.constant 0 : index
    %c0_5 = arith.constant 0 : index
    %12 = vector.load %arg3[%c0_4, %c0_5] : memref<1x32xf32, #tpu.memory_space<vmem>>, vector<1x32xf32>
    %13 = vector.broadcast %12 : vector<1x32xf32> to vector<232x32xf32>
    %14 = arith.addf %11, %13 : vector<232x32xf32>
    %cst_6 = arith.constant 0.000000e+00 : f32
    %15 = vector.broadcast %cst_6 : f32 to vector<232x32xf32>
    %16 = arith.maximumf %14, %15 : vector<232x32xf32>
    %17 = arith.truncf %16 : vector<232x32xf32> to vector<232x32xbf16>
    %18 = vector.extract_strided_slice %17 {offsets = [0, 0], sizes = [224, 32], strides = [1, 1]} : vector<232x32xbf16> to vector<224x32xbf16>
    %19 = vector.extract_strided_slice %17 {offsets = [1, 0], sizes = [224, 32], strides = [1, 1]} : vector<232x32xbf16> to vector<224x32xbf16>
    %20 = vector.extract_strided_slice %17 {offsets = [2, 0], sizes = [224, 32], strides = [1, 1]} : vector<232x32xbf16> to vector<224x32xbf16>
    %21 = tpu.concatenate %18, %19, %20 in 1 : vector<224x32xbf16>, vector<224x32xbf16>, vector<224x32xbf16> -> vector<224x96xbf16>
    %22 = vector.extract_strided_slice %21 {offsets = [0, 0], sizes = [192, 96], strides = [1, 1]} : vector<224x96xbf16> to vector<192x96xbf16>
    %23 = vector.extract_strided_slice %21 {offsets = [16, 0], sizes = [192, 96], strides = [1, 1]} : vector<224x96xbf16> to vector<192x96xbf16>
    %24 = vector.extract_strided_slice %21 {offsets = [32, 0], sizes = [192, 96], strides = [1, 1]} : vector<224x96xbf16> to vector<192x96xbf16>
    %25 = tpu.concatenate %22, %23, %24 in 1 : vector<192x96xbf16>, vector<192x96xbf16>, vector<192x96xbf16> -> vector<192x288xbf16>
    %c0_7 = arith.constant 0 : index
    %c0_8 = arith.constant 0 : index
    %26 = vector.load %arg4[%c0_7, %c0_8] : memref<288x32xbf16, #tpu.memory_space<vmem>>, vector<288x32xbf16>
    %cst_9 = arith.constant dense<0.000000e+00> : vector<192x32xf32>
    %27 = tpu.matmul %25, %26, %cst_9 {dimension_numbers = #tpu.dot_dimension_numbers<[1], [0], [0], [1], [0, 0, 1, 1], [], []>} : vector<192x288xbf16>, vector<288x32xbf16>, vector<192x32xf32> -> vector<192x32xf32>
    %c0_10 = arith.constant 0 : index
    %c0_11 = arith.constant 0 : index
    %28 = vector.load %arg5[%c0_10, %c0_11] : memref<1x32xf32, #tpu.memory_space<vmem>>, vector<1x32xf32>
    %29 = vector.broadcast %28 : vector<1x32xf32> to vector<192x32xf32>
    %30 = arith.addf %27, %29 : vector<192x32xf32>
    %cst_12 = arith.constant 0.000000e+00 : f32
    %31 = vector.broadcast %cst_12 : f32 to vector<192x32xf32>
    %32 = arith.maximumf %30, %31 : vector<192x32xf32>
    %c0_13 = arith.constant 0 : index
    %c0_14 = arith.constant 0 : index
    %c0_15 = arith.constant 0 : index
    %33 = vector.load %arg6[%c0_13, %c0_14, %c0_15] : memref<1x192x32xf32, #tpu.memory_space<vmem>>, vector<1x192x32xf32>
    %34 = vector.shape_cast %33 : vector<1x192x32xf32> to vector<192x32xf32>
    %35 = vector.shape_cast %32 : vector<192x32xf32> to vector<1x192x32xf32>
    tpu.vector_store %arg6[%c0_13, %c0_14, %c0_15], %35 {strides = array<i32>} : memref<1x192x32xf32, #tpu.memory_space<vmem>>, vector<1x192x32xf32>,
    return
  }
  func.func @transform_0(%arg0: i32) -> (i32, i32, i32) {
    %c0_i32 = arith.constant 0 : i32
    %c0_i32_0 = arith.constant 0 : i32
    %c0_i32_1 = arith.constant 0 : i32
    return %arg0, %c0_i32, %c0_i32_0 : i32, i32, i32
  }
  func.func @transform_1(%arg0: i32) -> (i32, i32) {
    %c0_i32 = arith.constant 0 : i32
    %c0_i32_0 = arith.constant 0 : i32
    %c0_i32_1 = arith.constant 0 : i32
    return %c0_i32, %c0_i32_0 : i32, i32
  }
  func.func @transform_2(%arg0: i32) -> (i32, i32) {
    %c0_i32 = arith.constant 0 : i32
    %c0_i32_0 = arith.constant 0 : i32
    %c0_i32_1 = arith.constant 0 : i32
    return %c0_i32, %c0_i32_0 : i32, i32
  }
  func.func @transform_3(%arg0: i32) -> (i32, i32) {
    %c0_i32 = arith.constant 0 : i32
    %c0_i32_0 = arith.constant 0 : i32
    %c0_i32_1 = arith.constant 0 : i32
    return %c0_i32, %c0_i32_0 : i32, i32
  }
  func.func @transform_4(%arg0: i32) -> (i32, i32) {
    %c0_i32 = arith.constant 0 : i32
    %c0_i32_0 = arith.constant 0 : i32
    %c0_i32_1 = arith.constant 0 : i32
    return %c0_i32, %c0_i32_0 : i32, i32
  }
  func.func @transform_5(%arg0: i32) -> (i32, i32, i32) {
    %c0_i32 = arith.constant 0 : i32
    %c0_i32_0 = arith.constant 0 : i32
    %c0_i32_1 = arith.constant 0 : i32
    return %arg0, %c0_i32, %c0_i32_0 : i32, i32, i32
  }
}

</mosaic_0001>

<llo_original>
// kernel: upconv_forward.1
$region0: #{upconv_forward.1}
  #allocation0 [shape = 'u32[]', space=smem, size = 0x4, offset = 0x4, fixed_abs, tag = 'smem constant byte address 0x4 - core index']
  #allocation1 [shape = 'u32[144,128]{1,0:T(1,128)}', space=vmem, size = 0x12000, scoped, tag = 'internal scratch']
  %s0 = inlined_call_operand.vmem [shape: bf16[2,272,64], index: 0, kind: input, shape index: {}]
  %s1 = inlined_call_operand.vmem [shape: bf16[576,32], index: 1, kind: input, shape index: {}]
  %s2 = inlined_call_operand.vmem [shape: f32[1,32], index: 2, kind: input, shape index: {}]
  %s3 = inlined_call_operand.vmem [shape: bf16[288,32], index: 3, kind: input, shape index: {}]
  %s4 = inlined_call_operand.vmem [shape: f32[1,32], index: 4, kind: input, shape index: {}]
  %s5 = inlined_call_operand.vmem [shape: f32[2,192,32], index: 5, kind: output, shape index: {}]
  %s6 = sld [smem:[#allocation0]]
  $region53: #{upconv_forward.1} parent=0
    _
  %s8 = ssub.s32 1, %s6
  %s9 = scalar_select 0, %s8, %s6
  loop: start=0, step=1, limit=4
  $region2: #{upconv_forward.1} parent=0 // loop_pre_header
    _
  $region3: #{upconv_forward.1} parent=0 // loop_header
    %s11 = sphi 0, %s15
    %p12 = scmp.ge.s32.totalorder %s11, 4
    %s21 = sphi 0, %s23
    %s24 = sphi 0, %s21
    %s25 = sphi 0, %s24
    %s41 = sphi 0, %s25
    %s45 = sphi 0, %s45
    %s47 = sphi 0, %s45
    %s48 = sphi 0, %s47
    %s62 = sphi 0, %s48
    %s66 = sphi 0, %s66
    %s68 = sphi 0, %s66
    %s69 = sphi 0, %s68
    %s83 = sphi 0, %s69
    %s87 = sphi 0, %s87
    %s89 = sphi 0, %s87
    %s90 = sphi 0, %s89
    %s104 = sphi 0, %s90
    %s108 = sphi 0, %s108
    %s110 = sphi 0, %s108
    %s111 = sphi 0, %s110
    %s125 = sphi 0, %s111
    %s131 = sphi 0, %s133
    %s134 = sphi 0, %s131
    %s135 = sphi 0, %s134
    %s151 = sphi 0, %s135
  $region4: #{upconv_forward.1} parent=0 // loop_header_branch
    %14 = sbr.rel (%p12) target = $region8
  $region5: #{upconv_forward.1} parent=0 // loop_body
    %s16 = ssub.s32 %s11, 1
    %s17 = ssub.s32 %s11, 2
    %s18 = sadd.s32 %s11, 1
    %s19 = ssub.s32 %s11, %s18
    %p20 = scmp.eq.s32.totalorder %s19, 0
    %s22 = sadd.s32 %s21, 1
    %s23 = scalar_select %p20, %s21, %s22
    %p26 = pneg %p20
    %p27 = scmp.eq.s32.totalorder %s11, 1
    %p28 = por %p26, %p27
    %p29 = scmp.ne.s32.totalorder %s21, %s24
    %p30 = scmp.eq.s32.totalorder %s11, 0
    %p31 = por %p29, %p30
    %p32 = scmp.ne.s32.totalorder %s21, %s24
    %p33 = scmp.eq.s32.totalorder %s16, 1
    %p34 = por %p32, %p33
    %p35 = scmp.ne.s32.totalorder %s24, %s25
    %p36 = scmp.eq.s32.totalorder %s16, 0
    %p37 = por %p35, %p36
    %p38 = scmp.ne.s32.totalorder %s24, %s25
    %p39 = scmp.eq.s32.totalorder %s17, 1
    %p40 = por %p38, %p39
    %p42 = scmp.ne.s32.totalorder %s25, %s41
    %p43 = scmp.eq.s32.totalorder %s17, 0
    %p44 = por %p42, %p43
    %s46 = sadd.s32 %s45, 1
    %p49 = scmp.eq.s32.totalorder %s11, 1
    %p50 = scmp.ne.s32.totalorder %s45, %s47
    %p51 = scmp.eq.s32.totalorder %s11, 0
    %p52 = por %p50, %p51
    %p53 = scmp.ne.s32.totalorder %s45, %s47
    %p54 = scmp.eq.s32.totalorder %s16, 1
    %p55 = por %p53, %p54
    %p56 = scmp.ne.s32.totalorder %s47, %s48
    %p57 = scmp.eq.s32.totalorder %s16, 0
    %p58 = por %p56, %p57
    %p59 = scmp.ne.s32.totalorder %s47, %s48
    %p60 = scmp.eq.s32.totalorder %s17, 1
    %p61 = por %p59, %p60
    %p63 = scmp.ne.s32.totalorder %s48, %s62
    %p64 = scmp.eq.s32.totalorder %s17, 0
    %p65 = por %p63, %p64
    %s67 = sadd.s32 %s66, 1
    %p70 = scmp.eq.s32.totalorder %s11, 1
    %p71 = scmp.ne.s32.totalorder %s66, %s68
    %p72 = scmp.eq.s32.totalorder %s11, 0
    %p73 = por %p71, %p72
    %p74 = scmp.ne.s32.totalorder %s66, %s68
    %p75 = scmp.eq.s32.totalorder %s16, 1
    %p76 = por %p74, %p75
    %p77 = scmp.ne.s32.totalorder %s68, %s69
    %p78 = scmp.eq.s32.totalorder %s16, 0
    %p79 = por %p77, %p78
    %p80 = scmp.ne.s32.totalorder %s68, %s69
    %p81 = scmp.eq.s32.totalorder %s17, 1
    %p82 = por %p80, %p81
    %p84 = scmp.ne.s32.totalorder %s69, %s83
    %p85 = scmp.eq.s32.totalorder %s17, 0
    %p86 = por %p84, %p85
    %s88 = sadd.s32 %s87, 1
    %p91 = scmp.eq.s32.totalorder %s11, 1
    %p92 = scmp.ne.s32.totalorder %s87, %s89
    %p93 = scmp.eq.s32.totalorder %s11, 0
    %p94 = por %p92, %p93
    %p95 = scmp.ne.s32.totalorder %s87, %s89
    %p96 = scmp.eq.s32.totalorder %s16, 1
    %p97 = por %p95, %p96
    %p98 = scmp.ne.s32.totalorder %s89, %s90
    %p99 = scmp.eq.s32.totalorder %s16, 0
    %p100 = por %p98, %p99
    %p101 = scmp.ne.s32.totalorder %s89, %s90
    %p102 = scmp.eq.s32.totalorder %s17, 1
    %p103 = por %p101, %p102
    %p105 = scmp.ne.s32.totalorder %s90, %s104
    %p106 = scmp.eq.s32.totalorder %s17, 0
    %p107 = por %p105, %p106
    %s109 = sadd.s32 %s108, 1
    %p112 = scmp.eq.s32.totalorder %s11, 1
    %p113 = scmp.ne.s32.totalorder %s108, %s110
    %p114 = scmp.eq.s32.totalorder %s11, 0
    %p115 = por %p113, %p114
    %p116 = scmp.ne.s32.totalorder %s108, %s110
    %p117 = scmp.eq.s32.totalorder %s16, 1
    %p118 = por %p116, %p117
    %p119 = scmp.ne.s32.totalorder %s110, %s111
    %p120 = scmp.eq.s32.totalorder %s16, 0
    %p121 = por %p119, %p120
    %p122 = scmp.ne.s32.totalorder %s110, %s111
    %p123 = scmp.eq.s32.totalorder %s17, 1
    %p124 = por %p122, %p123
    %p126 = scmp.ne.s32.totalorder %s111, %s125
    %p127 = scmp.eq.s32.totalorder %s17, 0
    %p128 = por %p126, %p127
    %s129 = ssub.s32 %s11, %s18
    %p130 = scmp.eq.s32.totalorder %s129, 0
    %s132 = sadd.s32 %s131, 1
    %s133 = scalar_select %p130, %s131, %s132
    %p136 = pneg %p130
    %p137 = scmp.eq.s32.totalorder %s11, 1
    %p138 = por %p136, %p137
    %p139 = scmp.ne.s32.totalorder %s131, %s134
    %p140 = scmp.eq.s32.totalorder %s11, 0
    %p141 = por %p139, %p140
    %p142 = scmp.ne.s32.totalorder %s131, %s134
    %p143 = scmp.eq.s32.totalorder %s16, 1
    %p144 = por %p142, %p143
    %p145 = scmp.ne.s32.totalorder %s134, %s135
    %p146 = scmp.eq.s32.totalorder %s16, 0
    %p147 = por %p145, %p146
    %p148 = scmp.ne.s32.totalorder %s134, %s135
    %p149 = scmp.eq.s32.totalorder %s17, 1
    %p150 = por %p148, %p149
    %p152 = scmp.ne.s32.totalorder %s135, %s151
    %p153 = scmp.eq.s32.totalorder %s17, 0
    %p154 = por %p152, %p153
    %p155 = scmp.le.s32.totalorder 1, %s11
    %p156 = scmp.lt.s32.totalorder %s11, 3
    %p157 = pnand %p155, %p156
    %p158 = pneg %p157
    // Predicated region
    $region9: #{upconv_forward.1} parent=5 // pred_check
      _
    $region10: #{upconv_forward.1} parent=5 // pred_check_branch
      %160 = sbr.rel (%p157) target = $region12
    $region11: #{upconv_forward.1} parent=5 // pred_region
      %s161 = ssub.s32 %s11, 1
      // Predicated region
      $region13: #{upconv_forward.1} parent=11 // pred_check
        %p162 = pneg %p58
      $region14: #{upconv_forward.1} parent=11 // pred_check_branch
        %164 = sbr.rel (%p162) target = $region16
      $region15: #{upconv_forward.1} parent=11 // pred_region
        _
      $region16: #{upconv_forward.1} parent=11 // pred_fallthru
        _
      // Predicated region
      $region17: #{upconv_forward.1} parent=11 // pred_check
        %p165 = pneg %p79
      $region18: #{upconv_forward.1} parent=11 // pred_check_branch
        %167 = sbr.rel (%p165) target = $region20
      $region19: #{upconv_forward.1} parent=11 // pred_region
        _
      $region20: #{upconv_forward.1} parent=11 // pred_fallthru
        _
      // Predicated region
      $region21: #{upconv_forward.1} parent=11 // pred_check
        %p168 = pneg %p100
      $region22: #{upconv_forward.1} parent=11 // pred_check_branch
        %170 = sbr.rel (%p168) target = $region24
      $region23: #{upconv_forward.1} parent=11 // pred_region
        _
      $region24: #{upconv_forward.1} parent=11 // pred_fallthru
        _
      // Predicated region
      $region25: #{upconv_forward.1} parent=11 // pred_check
        %p171 = pneg %p121
      $region26: #{upconv_forward.1} parent=11 // pred_check_branch
        %173 = sbr.rel (%p171) target = $region28
      $region27: #{upconv_forward.1} parent=11 // pred_region
        _
      $region28: #{upconv_forward.1} parent=11 // pred_fallthru
        _
    $region12: #{upconv_forward.1} parent=5 // pred_fallthru
      _
    %p174 = scmp.lt.s32.totalorder %s11, 2
    // Predicated region
    $region29: #{upconv_forward.1} parent=5 // pred_check
      %p175 = pneg %p174
    $region30: #{upconv_forward.1} parent=5 // pred_check_branch
      %177 = sbr.rel (%p175) target = $region32
    $region31: #{upconv_forward.1} parent=5 // pred_region
      // Predicated region
      $region33: #{upconv_forward.1} parent=31 // pred_check
        %p178 = pneg %p31
      $region34: #{upconv_forward.1} parent=31 // pred_check_branch
        %180 = sbr.rel (%p178) target = $region36
      $region35: #{upconv_forward.1} parent=31 // pred_region
        %p181 = scmp.lt.s32.totalorder %s11, 1
        %s182 = scalar_select %p181, %s11, 1
        %s183 = smul.addr %s182, 34
        %s184 = smul.addr %s183, 4
        %s185 = scalar_lea.vmem %s0, %s184
      $region36: #{upconv_forward.1} parent=31 // pred_fallthru
        _
    $region32: #{upconv_forward.1} parent=5 // pred_fallthru
      _
    %p186 = scmp.le.s32.totalorder 1, %s11
    %p187 = scmp.lt.s32.totalorder %s11, 3
    %p188 = pnand %p186, %p187
    %p189 = pneg %p188
    // Predicated region
    $region37: #{upconv_forward.1} parent=5 // pred_check
      _
    $region38: #{upconv_forward.1} parent=5 // pred_check_branch
      %191 = sbr.rel (%p188) target = $region40
    $region39: #{upconv_forward.1} parent=5 // pred_region
      %s192 = ssub.s32 %s11, 1
      %p193 = scmp.lt.s32.totalorder %s16, 1
      %s194 = scalar_select %p193, %s16, 1
      %s195 = smul.addr %s194, 34
      %s196 = smul.addr %s195, 4
      %s197 = scalar_lea.vmem %s0, %s196
      %p198 = pneg %p37
      %p199 = pneg %p34
      %p200 = pneg %p58
      %p201 = pneg %p55
      %p202 = pneg %p79
      %p203 = pneg %p76
      %p204 = pneg %p100
      %p205 = pneg %p97
      %p206 = pneg %p121
      %p207 = pneg %p118
      %p208 = pneg %p147
      %p209 = pneg %p144
      %p210 = scmp.lt.s32.totalorder %s16, 1
      %s211 = scalar_select %p210, %s16, 1
      %s212 = smul.addr %s211, 24
      %s213 = smul.addr %s212, 8
      %s214 = scalar_lea.vmem %s5, %s213
      %p215 = scmp.lt.s32.totalorder %s16, 1
      %s216 = scalar_select %p215, %s16, 1
      %s217 = smul.addr %s216, 34
      %s218 = smul.addr %s217, 4
      %s219 = scalar_lea.vmem %s0, %s218
      %p220 = scmp.lt.s32.totalorder %s16, 1
      %s221 = scalar_select %p220, %s16, 1
      %s222 = smul.addr %s221, 24
      %s223 = smul.addr %s222, 8
      %s224 = scalar_lea.vmem %s5, %s223
      %v226 = vld [vmem:[%s219] sm:$0xf]
      %v227 = vld [vmem:[%s219 + $0x4] sm:$0xf]
      %v228 = vld [vmem:[%s219 + $0x8] sm:$0xf]
      %v229 = vld [vmem:[%s219 + $0xc] sm:$0xf]
      %v230 = vld [vmem:[%s219 + $0x10] sm:$0xf]
      %v231 = vld [vmem:[%s219 + $0x14] sm:$0xf]
      %v232 = vld [vmem:[%s219 + $0x18] sm:$0xf]
      %v233 = vld [vmem:[%s219 + $0x1c] sm:$0xf]
      %v234 = vld [vmem:[%s219 + $0x20] sm:$0xf]
      %v235 = vld [vmem:[%s219 + $0x24] sm:$0xf]
      %v236 = vld [vmem:[%s219 + $0x28] sm:$0xf]
      %v237 = vld [vmem:[%s219 + $0x2c] sm:$0xf]
      %v238 = vld [vmem:[%s219 + $0x30] sm:$0xf]
      %v239 = vld [vmem:[%s219 + $0x34] sm:$0xf]
      %v240 = vld [vmem:[%s219 + $0x38] sm:$0xf]
      %v241 = vld [vmem:[%s219 + $0x3c] sm:$0xf]
      %v242 = vld [vmem:[%s219 + $0x40] sm:$0xf]
      %v243 = vld [vmem:[%s219 + $0x44] sm:$0xf]
      %v244 = vld [vmem:[%s219 + $0x48] sm:$0xf]
      %v245 = vld [vmem:[%s219 + $0x4c] sm:$0xf]
      %v246 = vld [vmem:[%s219 + $0x50] sm:$0xf]
      %v247 = vld [vmem:[%s219 + $0x54] sm:$0xf]
      %v248 = vld [vmem:[%s219 + $0x58] sm:$0xf]
      %v249 = vld [vmem:[%s219 + $0x5c] sm:$0xf]
      %v250 = vld [vmem:[%s219 + $0x60] sm:$0xf]
      %v251 = vld [vmem:[%s219 + $0x64] sm:$0xf]
      %v252 = vld [vmem:[%s219 + $0x68] sm:$0xf]
      %v253 = vld [vmem:[%s219 + $0x6c] sm:$0xf]
      %v254 = vld [vmem:[%s219 + $0x70] sm:$0xf]
      %v255 = vld [vmem:[%s219 + $0x74] sm:$0xf]
      %v256 = vld [vmem:[%s219 + $0x78] sm:$0xf]
      %v257 = vld [vmem:[%s219 + $0x7c] sm:$0xf]
      %v258 = vld [vmem:[%s219 + $0x80] sm:$0xf]
      %v259 = vld [vmem:[%s219 + $0x84] sm:$0xf]
      %v293 = vunpack.c.l.b16 %v226
      %v294 = vunpack.c.l.b16 %v227
      %v295 = vunpack.c.l.b16 %v228
      %v296 = vunpack.c.l.b16 %v229
      %v297 = vunpack.c.l.b16 %v230
      %v298 = vunpack.c.l.b16 %v231
      %v299 = vunpack.c.l.b16 %v232
      %v300 = vunpack.c.l.b16 %v233
      %v301 = vunpack.c.l.b16 %v234
      %v302 = vunpack.c.l.b16 %v235
      %v303 = vunpack.c.l.b16 %v236
      %v304 = vunpack.c.l.b16 %v237
      %v305 = vunpack.c.l.b16 %v238
      %v306 = vunpack.c.l.b16 %v239
      %v307 = vunpack.c.l.b16 %v240
      %v308 = vunpack.c.l.b16 %v241
      %v309 = vunpack.c.l.b16 %v242
      %v310 = vunpack.c.l.b16 %v243
      %v311 = vunpack.c.l.b16 %v244
      %v312 = vunpack.c.l.b16 %v245
      %v313 = vunpack.c.l.b16 %v246
      %v314 = vunpack.c.l.b16 %v247
      %v315 = vunpack.c.l.b16 %v248
      %v316 = vunpack.c.l.b16 %v249
      %v317 = vunpack.c.l.b16 %v250
      %v318 = vunpack.c.l.b16 %v251
      %v319 = vunpack.c.l.b16 %v252
      %v320 = vunpack.c.l.b16 %v253
      %v321 = vunpack.c.l.b16 %v254
      %v322 = vunpack.c.l.b16 %v255
      %v323 = vunpack.c.l.b16 %v256
      %v324 = vunpack.c.l.b16 %v257
      %v325 = vunpack.c.l.b16 %v258
      %v326 = vpack.c.b16 %v294, %v293
      %v327 = vpack.c.b16 %v296, %v295
      %v328 = vpack.c.b16 %v298, %v297
      %v329 = vpack.c.b16 %v300, %v299
      %v330 = vpack.c.b16 %v302, %v301
      %v331 = vpack.c.b16 %v304, %v303
      %v332 = vpack.c.b16 %v306, %v305
      %v333 = vpack.c.b16 %v308, %v307
      %v334 = vpack.c.b16 %v310, %v309
      %v335 = vpack.c.b16 %v312, %v311
      %v336 = vpack.c.b16 %v314, %v313
      %v337 = vpack.c.b16 %v316, %v315
      %v338 = vpack.c.b16 %v318, %v317
      %v339 = vpack.c.b16 %v320, %v319
      %v340 = vpack.c.b16 %v322, %v321
      %v341 = vpack.c.b16 %v324, %v323
      %v342 = vpack.c.b16 %v325, %v325
      %v344 = vunpack.c.l.b16 %v259
      %v345 = vpack.c.b16 %v344, %v325
      %vm346 = vsmask.f32 7424
      %v348 = vshrl.u32 %v326, 16
      %v350 = vshll.u32 %v326, 16
      %v352 = vrot.slane %v350, 1
      %v353 = vor.u32 %v348, %v352
      %v355 = vshll.u32 %v327, 16
      %v357 = vrot.slane %v355, 1
      %v358 = vsel %vm346, %v353, %v357
      %v359 = vshrl.u32 %v327, 16
      %v361 = vor.u32 %v359, %v357
      %v363 = vshll.u32 %v328, 16
      %v365 = vrot.slane %v363, 1
      %v366 = vsel %vm346, %v361, %v365
      %v367 = vshrl.u32 %v328, 16
      %v369 = vor.u32 %v367, %v365
      %v371 = vshll.u32 %v329, 16
      %v373 = vrot.slane %v371, 1
      %v374 = vsel %vm346, %v369, %v373
      %v375 = vshrl.u32 %v329, 16
      %v377 = vor.u32 %v375, %v373
      %v379 = vshll.u32 %v330, 16
      %v381 = vrot.slane %v379, 1
      %v382 = vsel %vm346, %v377, %v381
      %v383 = vshrl.u32 %v330, 16
      %v385 = vor.u32 %v383, %v381
      %v387 = vshll.u32 %v331, 16
      %v389 = vrot.slane %v387, 1
      %v390 = vsel %vm346, %v385, %v389
      %v391 = vshrl.u32 %v331, 16
      %v393 = vor.u32 %v391, %v389
      %v395 = vshll.u32 %v332, 16
      %v397 = vrot.slane %v395, 1
      %v398 = vsel %vm346, %v393, %v397
      %v399 = vshrl.u32 %v332, 16
      %v401 = vor.u32 %v399, %v397
      %v403 = vshll.u32 %v333, 16
      %v405 = vrot.slane %v403, 1
      %v406 = vsel %vm346, %v401, %v405
      %v407 = vshrl.u32 %v333, 16
      %v409 = vor.u32 %v407, %v405
      %v411 = vshll.u32 %v334, 16
      %v413 = vrot.slane %v411, 1
      %v414 = vsel %vm346, %v409, %v413
      %v415 = vshrl.u32 %v334, 16
      %v417 = vor.u32 %v415, %v413
      %v419 = vshll.u32 %v335, 16
      %v421 = vrot.slane %v419, 1
      %v422 = vsel %vm346, %v417, %v421
      %v423 = vshrl.u32 %v335, 16
      %v425 = vor.u32 %v423, %v421
      %v427 = vshll.u32 %v336, 16
      %v429 = vrot.slane %v427, 1
      %v430 = vsel %vm346, %v425, %v429
      %v431 = vshrl.u32 %v336, 16
      %v433 = vor.u32 %v431, %v429
      %v435 = vshll.u32 %v337, 16
      %v437 = vrot.slane %v435, 1
      %v438 = vsel %vm346, %v433, %v437
      %v439 = vshrl.u32 %v337, 16
      %v441 = vor.u32 %v439, %v437
      %v443 = vshll.u32 %v338, 16
      %v445 = vrot.slane %v443, 1
      %v446 = vsel %vm346, %v441, %v445
      %v447 = vshrl.u32 %v338, 16
      %v449 = vor.u32 %v447, %v445
      %v451 = vshll.u32 %v339, 16
      %v453 = vrot.slane %v451, 1
      %v454 = vsel %vm346, %v449, %v453
      %v455 = vshrl.u32 %v339, 16
      %v457 = vor.u32 %v455, %v453
      %v459 = vshll.u32 %v340, 16
      %v461 = vrot.slane %v459, 1
      %v462 = vsel %vm346, %v457, %v461
      %v463 = vshrl.u32 %v340, 16
      %v465 = vor.u32 %v463, %v461
      %v467 = vshll.u32 %v341, 16
      %v469 = vrot.slane %v467, 1
      %v470 = vsel %vm346, %v465, %v469
      %v471 = vshrl.u32 %v341, 16
      %v473 = vor.u32 %v471, %v469
      %v475 = vshll.u32 %v345, 16
      %v477 = vrot.slane %v475, 1
      %v478 = vsel %vm346, %v473, %v477
      %v479 = vshrl.u32 %v345, 16
      %v481 = vor.u32 %v479, %v477
      %482 = vrot.lane.b32.xlu0 %v358, 64
      %v483 = vpop.permute.xlu0 %482
      %484 = vrot.lane.b32.xlu0 %v366, 64
      %v485 = vpop.permute.xlu0 %484
      %486 = vrot.lane.b32.xlu0 %v374, 64
      %v487 = vpop.permute.xlu0 %486
      %488 = vrot.lane.b32.xlu0 %v382, 64
      %v489 = vpop.permute.xlu0 %488
      %490 = vrot.lane.b32.xlu0 %v390, 64
      %v491 = vpop.permute.xlu0 %490
      %492 = vrot.lane.b32.xlu0 %v398, 64
      %v493 = vpop.permute.xlu0 %492
      %494 = vrot.lane.b32.xlu0 %v406, 64
      %v495 = vpop.permute.xlu0 %494
      %496 = vrot.lane.b32.xlu0 %v414, 64
      %v497 = vpop.permute.xlu0 %496
      %498 = vrot.lane.b32.xlu0 %v422, 64
      %v499 = vpop.permute.xlu0 %498
      %500 = vrot.lane.b32.xlu0 %v430, 64
      %v501 = vpop.permute.xlu0 %500
      %502 = vrot.lane.b32.xlu0 %v438, 64
      %v503 = vpop.permute.xlu0 %502
      %504 = vrot.lane.b32.xlu0 %v446, 64
      %v505 = vpop.permute.xlu0 %504
      %506 = vrot.lane.b32.xlu0 %v454, 64
      %v507 = vpop.permute.xlu0 %506
      %508 = vrot.lane.b32.xlu0 %v462, 64
      %v509 = vpop.permute.xlu0 %508
      %510 = vrot.lane.b32.xlu0 %v470, 64
      %v511 = vpop.permute.xlu0 %510
      %512 = vrot.lane.b32.xlu0 %v478, 64
      %v513 = vpop.permute.xlu0 %512
      %514 = vrot.lane.b32.xlu0 %v481, 64
      %v515 = vpop.permute.xlu0 %514
      %vm516 = vcmask 1046528
      %v517 = vrot.slane %v326, 1
      %v518 = vrot.slane %v327, 1
      %v519 = vsel %vm516, %v517, %v518
      %v520 = vrot.slane %v328, 1
      %v521 = vsel %vm516, %v518, %v520
      %v522 = vrot.slane %v329, 1
      %v523 = vsel %vm516, %v520, %v522
      %v524 = vrot.slane %v330, 1
      %v525 = vsel %vm516, %v522, %v524
      %v526 = vrot.slane %v331, 1
      %v527 = vsel %vm516, %v524, %v526
      %v528 = vrot.slane %v332, 1
      %v529 = vsel %vm516, %v526, %v528
      %v530 = vrot.slane %v333, 1
      %v531 = vsel %vm516, %v528, %v530
      %v532 = vrot.slane %v334, 1
      %v533 = vsel %vm516, %v530, %v532
      %v534 = vrot.slane %v335, 1
      %v535 = vsel %vm516, %v532, %v534
      %v536 = vrot.slane %v336, 1
      %v537 = vsel %vm516, %v534, %v536
      %v538 = vrot.slane %v337, 1
      %v539 = vsel %vm516, %v536, %v538
      %v540 = vrot.slane %v338, 1
      %v541 = vsel %vm516, %v538, %v540
      %v542 = vrot.slane %v339, 1
      %v543 = vsel %vm516, %v540, %v542
      %v544 = vrot.slane %v340, 1
      %v545 = vsel %vm516, %v542, %v544
      %v546 = vrot.slane %v341, 1
      %v547 = vsel %vm516, %v544, %v546
      %v548 = vrot.slane %v345, 1
      %v549 = vsel %vm516, %v546, %v548
      %vm550 = vcmask 523264
      %v552 = vsel %vm550, %v326, %v483
      %v555 = vsel %vm550, %v327, %v485
      %v558 = vsel %vm550, %v328, %v487
      %v561 = vsel %vm550, %v329, %v489
      %v564 = vsel %vm550, %v330, %v491
      %v567 = vsel %vm550, %v331, %v493
      %v570 = vsel %vm550, %v332, %v495
      %v573 = vsel %vm550, %v333, %v497
      %v576 = vsel %vm550, %v334, %v499
      %v579 = vsel %vm550, %v335, %v501
      %v582 = vsel %vm550, %v336, %v503
      %v585 = vsel %vm550, %v337, %v505
      %v588 = vsel %vm550, %v338, %v507
      %v591 = vsel %vm550, %v339, %v509
      %v594 = vsel %vm550, %v340, %v511
      %v597 = vsel %vm550, %v341, %v513
      %v601 = vsel %vm550, %v342, %v515
      %618 = vrot.lane.b32.xlu0 %v555, 64
      %v619 = vpop.permute.xlu0 %618
      %620 = vrot.lane.b32.xlu0 %v521, 64
      %v621 = vpop.permute.xlu0 %620
      %622 = vrot.lane.b32.xlu0 %v558, 64
      %v623 = vpop.permute.xlu0 %622
      %624 = vrot.lane.b32.xlu0 %v523, 64
      %v625 = vpop.permute.xlu0 %624
      %626 = vrot.lane.b32.xlu0 %v561, 64
      %v627 = vpop.permute.xlu0 %626
      %628 = vrot.lane.b32.xlu0 %v525, 64
      %v629 = vpop.permute.xlu0 %628
      %630 = vrot.lane.b32.xlu0 %v564, 64
      %v631 = vpop.permute.xlu0 %630
      %632 = vrot.lane.b32.xlu0 %v527, 64
      %v633 = vpop.permute.xlu0 %632
      %634 = vrot.lane.b32.xlu0 %v567, 64
      %v635 = vpop.permute.xlu0 %634
      %636 = vrot.lane.b32.xlu0 %v529, 64
      %v637 = vpop.permute.xlu0 %636
      %638 = vrot.lane.b32.xlu0 %v570, 64
      %v639 = vpop.permute.xlu0 %638
      %640 = vrot.lane.b32.xlu0 %v531, 64
      %v641 = vpop.permute.xlu0 %640
      %642 = vrot.lane.b32.xlu0 %v573, 64
      %v643 = vpop.permute.xlu0 %642
      %644 = vrot.lane.b32.xlu0 %v533, 64
      %v645 = vpop.permute.xlu0 %644
      %646 = vrot.lane.b32.xlu0 %v576, 64
      %v647 = vpop.permute.xlu0 %646
      %648 = vrot.lane.b32.xlu0 %v535, 64
      %v649 = vpop.permute.xlu0 %648
      %650 = vrot.lane.b32.xlu0 %v579, 64
      %v651 = vpop.permute.xlu0 %650
      %652 = vrot.lane.b32.xlu0 %v537, 64
      %v653 = vpop.permute.xlu0 %652
      %654 = vrot.lane.b32.xlu0 %v582, 64
      %v655 = vpop.permute.xlu0 %654
      %656 = vrot.lane.b32.xlu0 %v539, 64
      %v657 = vpop.permute.xlu0 %656
      %658 = vrot.lane.b32.xlu0 %v585, 64
      %v659 = vpop.permute.xlu0 %658
      %660 = vrot.lane.b32.xlu0 %v541, 64
      %v661 = vpop.permute.xlu0 %660
      %662 = vrot.lane.b32.xlu0 %v588, 64
      %v663 = vpop.permute.xlu0 %662
      %664 = vrot.lane.b32.xlu0 %v543, 64
      %v665 = vpop.permute.xlu0 %664
      %666 = vrot.lane.b32.xlu0 %v591, 64
      %v667 = vpop.permute.xlu0 %666
      %668 = vrot.lane.b32.xlu0 %v545, 64
      %v669 = vpop.permute.xlu0 %668
      %670 = vrot.lane.b32.xlu0 %v594, 64
      %v671 = vpop.permute.xlu0 %670
      %672 = vrot.lane.b32.xlu0 %v547, 64
      %v673 = vpop.permute.xlu0 %672
      %674 = vrot.lane.b32.xlu0 %v597, 64
      %v675 = vpop.permute.xlu0 %674
      %676 = vrot.lane.b32.xlu0 %v549, 64
      %v677 = vpop.permute.xlu0 %676
      %vm678 = vcmask 523264
      %v679 = vsel %vm678, %v619, %v621
      %v680 = vsel %vm678, %v623, %v625
      %v681 = vsel %vm678, %v627, %v629
      %v682 = vsel %vm678, %v631, %v633
      %v683 = vsel %vm678, %v635, %v637
      %v684 = vsel %vm678, %v639, %v641
      %v685 = vsel %vm678, %v643, %v645
      %v686 = vsel %vm678, %v647, %v649
      %v687 = vsel %vm678, %v651, %v653
      %v688 = vsel %vm678, %v655, %v657
      %v689 = vsel %vm678, %v659, %v661
      %v690 = vsel %vm678, %v663, %v665
      %v691 = vsel %vm678, %v667, %v669
      %v692 = vsel %vm678, %v671, %v673
      %v693 = vsel %vm678, %v675, %v677
      %v711 = vsel %vm550, %v519, %v619
      %v715 = vsel %vm550, %v521, %v623
      %v719 = vsel %vm550, %v523, %v627
      %v723 = vsel %vm550, %v525, %v631
      %v727 = vsel %vm550, %v527, %v635
      %v731 = vsel %vm550, %v529, %v639
      %v735 = vsel %vm550, %v531, %v643
      %v739 = vsel %vm550, %v533, %v647
      %v743 = vsel %vm550, %v535, %v651
      %v747 = vsel %vm550, %v537, %v655
      %v751 = vsel %vm550, %v539, %v659
      %v755 = vsel %vm550, %v541, %v663
      %v759 = vsel %vm550, %v543, %v667
      %v763 = vsel %vm550, %v545, %v671
      %v767 = vsel %vm550, %v547, %v675
      %v769 = vld [vmem:[%s1] sm:$0xf]
      %v770 = vld [vmem:[%s1 + $0x4] sm:$0xf]
      %v771 = vld [vmem:[%s1 + $0x8] sm:$0xf]
      %v772 = vld [vmem:[%s1 + $0xc] sm:$0xf]
      %v773 = vld [vmem:[%s1 + $0x10] sm:$0xf]
      %v774 = vld [vmem:[%s1 + $0x14] sm:$0xf]
      %v775 = vld [vmem:[%s1 + $0x18] sm:$0xf]
      %v776 = vld [vmem:[%s1 + $0x1c] sm:$0xf]
      %v777 = vld [vmem:[%s1 + $0x20] sm:$0xf]
      %v778 = vld [vmem:[%s1 + $0x24] sm:$0xf]
      %v779 = vld [vmem:[%s1 + $0x28] sm:$0xf]
      %v780 = vld [vmem:[%s1 + $0x2c] sm:$0xf]
      %v781 = vld [vmem:[%s1 + $0x30] sm:$0xf]
      %v782 = vld [vmem:[%s1 + $0x34] sm:$0xf]
      %v783 = vld [vmem:[%s1 + $0x38] sm:$0xf]
      %v784 = vld [vmem:[%s1 + $0x3c] sm:$0xf]
      %v785 = vld [vmem:[%s1 + $0x40] sm:$0xf]
      %v786 = vld [vmem:[%s1 + $0x44] sm:$0xf]
      %v787 = vld [vmem:[%s1 + $0x48] sm:$0xf]
      %v788 = vld [vmem:[%s1 + $0x4c] sm:$0xf]
      %v789 = vld [vmem:[%s1 + $0x50] sm:$0xf]
      %v790 = vld [vmem:[%s1 + $0x54] sm:$0xf]
      %v791 = vld [vmem:[%s1 + $0x58] sm:$0xf]
      %v792 = vld [vmem:[%s1 + $0x5c] sm:$0xf]
      %v793 = vld [vmem:[%s1 + $0x60] sm:$0xf]
      %v794 = vld [vmem:[%s1 + $0x64] sm:$0xf]
      %v795 = vld [vmem:[%s1 + $0x68] sm:$0xf]
      %v796 = vld [vmem:[%s1 + $0x6c] sm:$0xf]
      %v797 = vld [vmem:[%s1 + $0x70] sm:$0xf]
      %v798 = vld [vmem:[%s1 + $0x74] sm:$0xf]
      %v799 = vld [vmem:[%s1 + $0x78] sm:$0xf]
      %v800 = vld [vmem:[%s1 + $0x7c] sm:$0xf]
      %v801 = vld [vmem:[%s1 + $0x80] sm:$0xf]
      %v802 = vld [vmem:[%s1 + $0x84] sm:$0xf]
      %v803 = vld [vmem:[%s1 + $0x88] sm:$0xf]
      %v804 = vld [vmem:[%s1 + $0x8c] sm:$0xf]
      %v805 = vld [vmem:[%s1 + $0x90] sm:$0xf]
      %v806 = vld [vmem:[%s1 + $0x94] sm:$0xf]
      %v807 = vld [vmem:[%s1 + $0x98] sm:$0xf]
      %v808 = vld [vmem:[%s1 + $0x9c] sm:$0xf]
      %v809 = vld [vmem:[%s1 + $0xa0] sm:$0xf]
      %v810 = vld [vmem:[%s1 + $0xa4] sm:$0xf]
      %v811 = vld [vmem:[%s1 + $0xa8] sm:$0xf]
      %v812 = vld [vmem:[%s1 + $0xac] sm:$0xf]
      %v813 = vld [vmem:[%s1 + $0xb0] sm:$0xf]
      %v814 = vld [vmem:[%s1 + $0xb4] sm:$0xf]
      %v815 = vld [vmem:[%s1 + $0xb8] sm:$0xf]
      %v816 = vld [vmem:[%s1 + $0xbc] sm:$0xf]
      %v817 = vld [vmem:[%s1 + $0xc0] sm:$0xf]
      %v818 = vld [vmem:[%s1 + $0xc4] sm:$0xf]
      %v819 = vld [vmem:[%s1 + $0xc8] sm:$0xf]
      %v820 = vld [vmem:[%s1 + $0xcc] sm:$0xf]
      %v821 = vld [vmem:[%s1 + $0xd0] sm:$0xf]
      %v822 = vld [vmem:[%s1 + $0xd4] sm:$0xf]
      %v823 = vld [vmem:[%s1 + $0xd8] sm:$0xf]
      %v824 = vld [vmem:[%s1 + $0xdc] sm:$0xf]
      %v825 = vld [vmem:[%s1 + $0xe0] sm:$0xf]
      %v826 = vld [vmem:[%s1 + $0xe4] sm:$0xf]
      %v827 = vld [vmem:[%s1 + $0xe8] sm:$0xf]
      %v828 = vld [vmem:[%s1 + $0xec] sm:$0xf]
      %v829 = vld [vmem:[%s1 + $0xf0] sm:$0xf]
      %v830 = vld [vmem:[%s1 + $0xf4] sm:$0xf]
      %v831 = vld [vmem:[%s1 + $0xf8] sm:$0xf]
      %v832 = vld [vmem:[%s1 + $0xfc] sm:$0xf]
      %v833 = vld [vmem:[%s1 + $0x100] sm:$0xf]
      %v834 = vld [vmem:[%s1 + $0x104] sm:$0xf]
      %v835 = vld [vmem:[%s1 + $0x108] sm:$0xf]
      %v836 = vld [vmem:[%s1 + $0x10c] sm:$0xf]
      %v837 = vld [vmem:[%s1 + $0x110] sm:$0xf]
      %v838 = vld [vmem:[%s1 + $0x114] sm:$0xf]
      %v839 = vld [vmem:[%s1 + $0x118] sm:$0xf]
      %v840 = vld [vmem:[%s1 + $0x11c] sm:$0xf]
      %v841 = vld [vmem:[%s2] sm:$0x1]
      %v843 = vlaneseq
      %v844 = vshrl.u32 %v843, 7
      %v845 = vsub.s32 0, %v844
      %v846 = vrot.slane %v841, %v845
      %v920 = vunpack.c.l.b16 %v769
      %v921 = vunpack.c.l.b16 %v770
      %v922 = vunpack.c.l.b16 %v771
      %v923 = vunpack.c.l.b16 %v772
      %v924 = vunpack.c.l.b16 %v773
      %v925 = vunpack.c.l.b16 %v774
      %v926 = vunpack.c.l.b16 %v775
      %v927 = vunpack.c.l.b16 %v776
      %v928 = vunpack.c.l.b16 %v777
      %v929 = vunpack.c.l.b16 %v778
      %v930 = vunpack.c.l.b16 %v779
      %v931 = vunpack.c.l.b16 %v780
      %v932 = vunpack.c.l.b16 %v781
      %v933 = vunpack.c.l.b16 %v782
      %v934 = vunpack.c.l.b16 %v783
      %v935 = vunpack.c.l.b16 %v784
      %v936 = vunpack.c.l.b16 %v785
      %v937 = vunpack.c.l.b16 %v786
      %v938 = vunpack.c.l.b16 %v787
      %v939 = vunpack.c.l.b16 %v788
      %v940 = vunpack.c.l.b16 %v789
      %v941 = vunpack.c.l.b16 %v790
      %v942 = vunpack.c.l.b16 %v791
      %v943 = vunpack.c.l.b16 %v792
      %v944 = vunpack.c.l.b16 %v793
      %v945 = vunpack.c.l.b16 %v794
      %v946 = vunpack.c.l.b16 %v795
      %v947 = vunpack.c.l.b16 %v796
      %v948 = vunpack.c.l.b16 %v797
      %v949 = vunpack.c.l.b16 %v798
      %v950 = vunpack.c.l.b16 %v799
      %v951 = vunpack.c.l.b16 %v800
      %v952 = vunpack.c.l.b16 %v801
      %v953 = vunpack.c.l.b16 %v802
      %v954 = vunpack.c.l.b16 %v803
      %v955 = vunpack.c.l.b16 %v804
      %v956 = vunpack.c.l.b16 %v805
      %v957 = vunpack.c.l.b16 %v806
      %v958 = vunpack.c.l.b16 %v807
      %v959 = vunpack.c.l.b16 %v808
      %v960 = vunpack.c.l.b16 %v809
      %v961 = vunpack.c.l.b16 %v810
      %v962 = vunpack.c.l.b16 %v811
      %v963 = vunpack.c.l.b16 %v812
      %v964 = vunpack.c.l.b16 %v813
      %v965 = vunpack.c.l.b16 %v814
      %v966 = vunpack.c.l.b16 %v815
      %v967 = vunpack.c.l.b16 %v816
      %v968 = vunpack.c.l.b16 %v817
      %v969 = vunpack.c.l.b16 %v818
      %v970 = vunpack.c.l.b16 %v819
      %v971 = vunpack.c.l.b16 %v820
      %v972 = vunpack.c.l.b16 %v821
      %v973 = vunpack.c.l.b16 %v822
      %v974 = vunpack.c.l.b16 %v823
      %v975 = vunpack.c.l.b16 %v824
      %v976 = vunpack.c.l.b16 %v825
      %v977 = vunpack.c.l.b16 %v826
      %v978 = vunpack.c.l.b16 %v827
      %v979 = vunpack.c.l.b16 %v828
      %v980 = vunpack.c.l.b16 %v829
      %v981 = vunpack.c.l.b16 %v830
      %v982 = vunpack.c.l.b16 %v831
      %v983 = vunpack.c.l.b16 %v832
      %v984 = vunpack.c.l.b16 %v833
      %v985 = vunpack.c.l.b16 %v834
      %v986 = vunpack.c.l.b16 %v835
      %v987 = vunpack.c.l.b16 %v836
      %v988 = vunpack.c.l.b16 %v837
      %v989 = vunpack.c.l.b16 %v838
      %v990 = vunpack.c.l.b16 %v839
      %v991 = vunpack.c.l.b16 %v840
      %v992 = vpack.c.b16 %v921, %v920
      %v993 = vpack.c.b16 %v923, %v922
      %v994 = vpack.c.b16 %v925, %v924
      %v995 = vpack.c.b16 %v927, %v926
      %v996 = vpack.c.b16 %v929, %v928
      %v997 = vpack.c.b16 %v931, %v930
      %v998 = vpack.c.b16 %v933, %v932
      %v999 = vpack.c.b16 %v935, %v934
      %v1000 = vpack.c.b16 %v937, %v936
      %v1001 = vpack.c.b16 %v939, %v938
      %v1002 = vpack.c.b16 %v941, %v940
      %v1003 = vpack.c.b16 %v943, %v942
      %v1004 = vpack.c.b16 %v945, %v944
      %v1005 = vpack.c.b16 %v947, %v946
      %v1006 = vpack.c.b16 %v949, %v948
      %v1007 = vpack.c.b16 %v951, %v950
      %v1008 = vpack.c.b16 %v953, %v952
      %v1009 = vpack.c.b16 %v955, %v954
      %v1010 = vpack.c.b16 %v957, %v956
      %v1011 = vpack.c.b16 %v959, %v958
      %v1012 = vpack.c.b16 %v961, %v960
      %v1013 = vpack.c.b16 %v963, %v962
      %v1014 = vpack.c.b16 %v965, %v964
      %v1015 = vpack.c.b16 %v967, %v966
      %v1016 = vpack.c.b16 %v969, %v968
      %v1017 = vpack.c.b16 %v971, %v970
      %v1018 = vpack.c.b16 %v973, %v972
      %v1019 = vpack.c.b16 %v975, %v974
      %v1020 = vpack.c.b16 %v977, %v976
      %v1021 = vpack.c.b16 %v979, %v978
      %v1022 = vpack.c.b16 %v981, %v980
      %v1023 = vpack.c.b16 %v983, %v982
      %v1024 = vpack.c.b16 %v985, %v984
      %v1025 = vpack.c.b16 %v987, %v986
      %v1026 = vpack.c.b16 %v989, %v988
      %v1027 = vpack.c.b16 %v991, %v990
      %v1064 = vsel %vm550, %v523, 0
      %v1066 = vsel %vm550, %v525, 0
      %v1068 = vsel %vm550, %v527, 0
      %v1070 = vsel %vm550, %v529, 0
      %v1072 = vsel %vm550, %v531, 0
      %v1074 = vsel %vm550, %v533, 0
      %v1076 = vsel %vm550, %v535, 0
      %v1078 = vsel %vm550, %v537, 0
      %v1080 = vsel %vm550, %v539, 0
      %v1082 = vsel %vm550, %v541, 0
      %v1084 = vsel %vm550, %v543, 0
      %v1086 = vsel %vm550, %v545, 0
      %v1088 = vsel %vm550, %v547, 0
      %v1091 = vsel %vm550, %v549, 0
      %v1094 = vsel %vm550, %v548, 0
      %1096 = vmatprep.subr.bf16.mxu0 0
      %1097 = vmatpush1.bf16.msra.mxu0 %v999
      %1098 = vmatprep.subr.bf16.mxu0 0
      %1099 = vmatpush1.bf16.msra.mxu0 %v998
      %1100 = vmatprep.subr.bf16.mxu0 0
      %1101 = vmatpush1.bf16.msra.mxu0 %v997
      %1102 = vmatprep.subr.bf16.mxu0 0
      %1103 = vmatpush1.bf16.msra.mxu0 %v996
      %1104 = vmatprep.subr.bf16.mxu0 0
      %1105 = vmatpush1.bf16.msra.mxu0 %v995
      %1106 = vmatprep.subr.bf16.mxu0 0
      %1107 = vmatpush1.bf16.msra.mxu0 %v994
      %1108 = vmatprep.subr.bf16.mxu0 0
      %1109 = vmatpush1.bf16.msra.mxu0 %v993
      %1110 = vmatprep.subr.bf16.mxu0 0
      %1111 = vmatpush1.bf16.msra.mxu0 %v992
      %1112 = vmatprep.subr.bf16.mxu0 0
      %1113 = vmatpush2.bf16.msra.mxu0 %v1007
      %1114 = vmatprep.subr.bf16.mxu0 0
      %1115 = vmatpush2.bf16.msra.mxu0 %v1006
      %1116 = vmatprep.subr.bf16.mxu0 0
      %1117 = vmatpush2.bf16.msra.mxu0 %v1005
      %1118 = vmatprep.subr.bf16.mxu0 0
      %1119 = vmatpush2.bf16.msra.mxu0 %v1004
      %1120 = vmatprep.subr.bf16.mxu0 0
      %1121 = vmatpush2.bf16.msra.mxu0 %v1003
      %1122 = vmatprep.subr.bf16.mxu0 0
      %1123 = vmatpush2.bf16.msra.mxu0 %v1002
      %1124 = vmatprep.subr.bf16.mxu0 0
      %1125 = vmatpush2.bf16.msra.mxu0 %v1001
      %1126 = vmatprep.subr.bf16.mxu0 0
      %1127 = vmatpush2.bf16.msra.mxu0 %v1000
      %1128 = vmatprep.mubr.bf16.mxu0 %v711
      %1129 = vmatmul.mubr.bf16.gmra.mxu0 %v552
      %v1130 = vpop.f32.mrf.mxu0
      %v1131 = vadd.f32 %v846, %v1130
      %v1132 = vpop.f32.mrf.mxu0
      %v1133 = vpop.f32.mrf.mxu0
      %v1134 = vadd.f32 %v846, %v1133
      %v1135 = vpop.f32.mrf.mxu0
      %1136 = vmatprep.mubr.bf16.mxu0 %v715
      %1137 = vmatmul.mubr.bf16.gmra.mxu0 %v555
      %v1138 = vpop.f32.mrf.mxu0
      %v1139 = vadd.f32 %v846, %v1138
      %v1140 = vpop.f32.mrf.mxu0
      %v1141 = vpop.f32.mrf.mxu0
      %v1142 = vadd.f32 %v846, %v1141
      %v1143 = vpop.f32.mrf.mxu0
      %1144 = vmatprep.mubr.bf16.mxu0 %v719
      %1145 = vmatmul.mubr.bf16.gmra.mxu0 %v558
      %v1146 = vpop.f32.mrf.mxu0
      %v1147 = vadd.f32 %v846, %v1146
      %v1148 = vpop.f32.mrf.mxu0
      %v1149 = vpop.f32.mrf.mxu0
      %v1150 = vadd.f32 %v846, %v1149
      %v1151 = vpop.f32.mrf.mxu0
      %1152 = vmatprep.mubr.bf16.mxu0 %v723
      %1153 = vmatmul.mubr.bf16.gmra.mxu0 %v561
      %v1154 = vpop.f32.mrf.mxu0
      %v1155 = vadd.f32 %v846, %v1154
      %v1156 = vpop.f32.mrf.mxu0
      %v1157 = vpop.f32.mrf.mxu0
      %v1158 = vadd.f32 %v846, %v1157
      %v1159 = vpop.f32.mrf.mxu0
      %1160 = vmatprep.mubr.bf16.mxu0 %v727
      %1161 = vmatmul.mubr.bf16.gmra.mxu0 %v564
      %v1162 = vpop.f32.mrf.mxu0
      %v1163 = vadd.f32 %v846, %v1162
      %v1164 = vpop.f32.mrf.mxu0
      %v1165 = vpop.f32.mrf.mxu0
      %v1166 = vadd.f32 %v846, %v1165
      %v1167 = vpop.f32.mrf.mxu0
      %1168 = vmatprep.mubr.bf16.mxu0 %v731
      %1169 = vmatmul.mubr.bf16.gmra.mxu0 %v567
      %v1170 = vpop.f32.mrf.mxu0
      %v1171 = vadd.f32 %v846, %v1170
      %v1172 = vpop.f32.mrf.mxu0
      %v1173 = vpop.f32.mrf.mxu0
      %v1174 = vadd.f32 %v846, %v1173
      %v1175 = vpop.f32.mrf.mxu0
      %1176 = vmatprep.mubr.bf16.mxu0 %v735
      %1177 = vmatmul.mubr.bf16.gmra.mxu0 %v570
      %v1178 = vpop.f32.mrf.mxu0
      %v1179 = vadd.f32 %v846, %v1178
      %v1180 = vpop.f32.mrf.mxu0
      %v1181 = vpop.f32.mrf.mxu0
      %v1182 = vadd.f32 %v846, %v1181
      %v1183 = vpop.f32.mrf.mxu0
      %1184 = vmatprep.mubr.bf16.mxu0 %v739
      %1185 = vmatmul.mubr.bf16.gmra.mxu0 %v573
      %v1186 = vpop.f32.mrf.mxu0
      %v1187 = vadd.f32 %v846, %v1186
      %v1188 = vpop.f32.mrf.mxu0
      %v1189 = vpop.f32.mrf.mxu0
      %v1190 = vadd.f32 %v846, %v1189
      %v1191 = vpop.f32.mrf.mxu0
      %1192 = vmatprep.mubr.bf16.mxu0 %v743
      %1193 = vmatmul.mubr.bf16.gmra.mxu0 %v576
      %v1194 = vpop.f32.mrf.mxu0
      %v1195 = vadd.f32 %v846, %v1194
      %v1196 = vpop.f32.mrf.mxu0
      %v1197 = vpop.f32.mrf.mxu0
      %v1198 = vadd.f32 %v846, %v1197
      %v1199 = vpop.f32.mrf.mxu0
      %1200 = vmatprep.mubr.bf16.mxu0 %v747
      %1201 = vmatmul.mubr.bf16.gmra.mxu0 %v579
      %v1202 = vpop.f32.mrf.mxu0
      %v1203 = vadd.f32 %v846, %v1202
      %v1204 = vpop.f32.mrf.mxu0
      %v1205 = vpop.f32.mrf.mxu0
      %v1206 = vadd.f32 %v846, %v1205
      %v1207 = vpop.f32.mrf.mxu0
      %1208 = vmatprep.mubr.bf16.mxu0 %v751
      %1209 = vmatmul.mubr.bf16.gmra.mxu0 %v582
      %v1210 = vpop.f32.mrf.mxu0
      %v1211 = vadd.f32 %v846, %v1210
      %v1212 = vpop.f32.mrf.mxu0
      %v1213 = vpop.f32.mrf.mxu0
      %v1214 = vadd.f32 %v846, %v1213
      %v1215 = vpop.f32.mrf.mxu0
      %1216 = vmatprep.mubr.bf16.mxu0 %v755
      %1217 = vmatmul.mubr.bf16.gmra.mxu0 %v585
      %v1218 = vpop.f32.mrf.mxu0
      %v1219 = vadd.f32 %v846, %v1218
      %v1220 = vpop.f32.mrf.mxu0
      %v1221 = vpop.f32.mrf.mxu0
      %v1222 = vadd.f32 %v846, %v1221
      %v1223 = vpop.f32.mrf.mxu0
      %1224 = vmatprep.mubr.bf16.mxu0 %v759
      %1225 = vmatmul.mubr.bf16.gmra.mxu0 %v588
      %v1226 = vpop.f32.mrf.mxu0
      %v1227 = vadd.f32 %v846, %v1226
      %v1228 = vpop.f32.mrf.mxu0
      %v1229 = vpop.f32.mrf.mxu0
      %v1230 = vadd.f32 %v846, %v1229
      %v1231 = vpop.f32.mrf.mxu0
      %1232 = vmatprep.mubr.bf16.mxu0 %v763
      %1233 = vmatmul.mubr.bf16.gmra.mxu0 %v591
      %v1234 = vpop.f32.mrf.mxu0
      %v1235 = vadd.f32 %v846, %v1234
      %v1236 = vpop.f32.mrf.mxu0
      %v1237 = vpop.f32.mrf.mxu0
      %v1238 = vadd.f32 %v846, %v1237
      %v1239 = vpop.f32.mrf.mxu0
      %1240 = vmatprep.mubr.bf16.mxu0 %v767
      %1241 = vmatmul.mubr.bf16.gmra.mxu0 %v594
      %v1242 = vpop.f32.mrf.mxu0
      %v1243 = vadd.f32 %v846, %v1242
      %v1244 = vpop.f32.mrf.mxu0
      %v1245 = vpop.f32.mrf.mxu0
      %v1246 = vpop.f32.mrf.mxu0
      %1247 = vdwg.mxu0
      %1248 = vmatprep.subr.bf16.mxu0 0
      %1249 = vmatpush1.bf16.msra.mxu0 %v1015
      %1250 = vmatprep.subr.bf16.mxu0 0
      %1251 = vmatpush1.bf16.msra.mxu0 %v1014
      %1252 = vmatprep.subr.bf16.mxu0 0
      %1253 = vmatpush1.bf16.msra.mxu0 %v1013
      %1254 = vmatprep.subr.bf16.mxu0 0
      %1255 = vmatpush1.bf16.msra.mxu0 %v1012
      %1256 = vmatprep.subr.bf16.mxu0 0
      %1257 = vmatpush1.bf16.msra.mxu0 %v1011
      %1258 = vmatprep.subr.bf16.mxu0 0
      %1259 = vmatpush1.bf16.msra.mxu0 %v1010
      %1260 = vmatprep.subr.bf16.mxu0 0
      %1261 = vmatpush1.bf16.msra.mxu0 %v1009
      %1262 = vmatprep.subr.bf16.mxu0 0
      %1263 = vmatpush1.bf16.msra.mxu0 %v1008
      %1264 = vmatprep.subr.bf16.mxu0 0
      %1265 = vmatpush2.bf16.msra.mxu0 %v1023
      %1266 = vmatprep.subr.bf16.mxu0 0
      %1267 = vmatpush2.bf16.msra.mxu0 %v1022
      %1268 = vmatprep.subr.bf16.mxu0 0
      %1269 = vmatpush2.bf16.msra.mxu0 %v1021
      %1270 = vmatprep.subr.bf16.mxu0 0
      %1271 = vmatpush2.bf16.msra.mxu0 %v1020
      %1272 = vmatprep.subr.bf16.mxu0 0
      %1273 = vmatpush2.bf16.msra.mxu0 %v1019
      %1274 = vmatprep.subr.bf16.mxu0 0
      %1275 = vmatpush2.bf16.msra.mxu0 %v1018
      %1276 = vmatprep.subr.bf16.mxu0 0
      %1277 = vmatpush2.bf16.msra.mxu0 %v1017
      %1278 = vmatprep.subr.bf16.mxu0 0
      %1279 = vmatpush2.bf16.msra.mxu0 %v1016
      %1280 = vmatprep.mubr.bf16.mxu0 %v558
      %1281 = vmatmul.mubr.bf16.gmra.mxu0 %v679
      %v1282 = vpop.f32.mrf.mxu0
      %v1283 = vadd.f32 %v1131, %v1282
      %v1284 = vpop.f32.mrf.mxu0
      %v1285 = vpop.f32.mrf.mxu0
      %v1286 = vadd.f32 %v1134, %v1285
      %v1287 = vpop.f32.mrf.mxu0
      %1288 = vmatprep.mubr.bf16.mxu0 %v561
      %1289 = vmatmul.mubr.bf16.gmra.mxu0 %v680
      %v1290 = vpop.f32.mrf.mxu0
      %v1291 = vadd.f32 %v1139, %v1290
      %v1292 = vpop.f32.mrf.mxu0
      %v1293 = vpop.f32.mrf.mxu0
      %v1294 = vadd.f32 %v1142, %v1293
      %v1295 = vpop.f32.mrf.mxu0
      %1296 = vmatprep.mubr.bf16.mxu0 %v564
      %1297 = vmatmul.mubr.bf16.gmra.mxu0 %v681
      %v1298 = vpop.f32.mrf.mxu0
      %v1299 = vadd.f32 %v1147, %v1298
      %v1300 = vpop.f32.mrf.mxu0
      %v1301 = vpop.f32.mrf.mxu0
      %v1302 = vadd.f32 %v1150, %v1301
      %v1303 = vpop.f32.mrf.mxu0
      %1304 = vmatprep.mubr.bf16.mxu0 %v567
      %1305 = vmatmul.mubr.bf16.gmra.mxu0 %v682
      %v1306 = vpop.f32.mrf.mxu0
      %v1307 = vadd.f32 %v1155, %v1306
      %v1308 = vpop.f32.mrf.mxu0
      %v1309 = vpop.f32.mrf.mxu0
      %v1310 = vadd.f32 %v1158, %v1309
      %v1311 = vpop.f32.mrf.mxu0
      %1312 = vmatprep.mubr.bf16.mxu0 %v570
      %1313 = vmatmul.mubr.bf16.gmra.mxu0 %v683
      %v1314 = vpop.f32.mrf.mxu0
      %v1315 = vadd.f32 %v1163, %v1314
      %v1316 = vpop.f32.mrf.mxu0
      %v1317 = vpop.f32.mrf.mxu0
      %v1318 = vadd.f32 %v1166, %v1317
      %v1319 = vpop.f32.mrf.mxu0
      %1320 = vmatprep.mubr.bf16.mxu0 %v573
      %1321 = vmatmul.mubr.bf16.gmra.mxu0 %v684
      %v1322 = vpop.f32.mrf.mxu0
      %v1323 = vadd.f32 %v1171, %v1322
      %v1324 = vpop.f32.mrf.mxu0
      %v1325 = vpop.f32.mrf.mxu0
      %v1326 = vadd.f32 %v1174, %v1325
      %v1327 = vpop.f32.mrf.mxu0
      %1328 = vmatprep.mubr.bf16.mxu0 %v576
      %1329 = vmatmul.mubr.bf16.gmra.mxu0 %v685
      %v1330 = vpop.f32.mrf.mxu0
      %v1331 = vadd.f32 %v1179, %v1330
      %v1332 = vpop.f32.mrf.mxu0
      %v1333 = vpop.f32.mrf.mxu0
      %v1334 = vadd.f32 %v1182, %v1333
      %v1335 = vpop.f32.mrf.mxu0
      %1336 = vmatprep.mubr.bf16.mxu0 %v579
      %1337 = vmatmul.mubr.bf16.gmra.mxu0 %v686
      %v1338 = vpop.f32.mrf.mxu0
      %v1339 = vadd.f32 %v1187, %v1338
      %v1340 = vpop.f32.mrf.mxu0
      %v1341 = vpop.f32.mrf.mxu0
      %v1342 = vadd.f32 %v1190, %v1341
      %v1343 = vpop.f32.mrf.mxu0
      %1344 = vmatprep.mubr.bf16.mxu0 %v582
      %1345 = vmatmul.mubr.bf16.gmra.mxu0 %v687
      %v1346 = vpop.f32.mrf.mxu0
      %v1347 = vadd.f32 %v1195, %v1346
      %v1348 = vpop.f32.mrf.mxu0
      %v1349 = vpop.f32.mrf.mxu0
      %v1350 = vadd.f32 %v1198, %v1349
      %v1351 = vpop.f32.mrf.mxu0
      %1352 = vmatprep.mubr.bf16.mxu0 %v585
      %1353 = vmatmul.mubr.bf16.gmra.mxu0 %v688
      %v1354 = vpop.f32.mrf.mxu0
      %v1355 = vadd.f32 %v1203, %v1354
      %v1356 = vpop.f32.mrf.mxu0
      %v1357 = vpop.f32.mrf.mxu0
      %v1358 = vadd.f32 %v1206, %v1357
      %v1359 = vpop.f32.mrf.mxu0
      %1360 = vmatprep.mubr.bf16.mxu0 %v588
      %1361 = vmatmul.mubr.bf16.gmra.mxu0 %v689
      %v1362 = vpop.f32.mrf.mxu0
      %v1363 = vadd.f32 %v1211, %v1362
      %v1364 = vpop.f32.mrf.mxu0
      %v1365 = vpop.f32.mrf.mxu0
      %v1366 = vadd.f32 %v1214, %v1365
      %v1367 = vpop.f32.mrf.mxu0
      %1368 = vmatprep.mubr.bf16.mxu0 %v591
      %1369 = vmatmul.mubr.bf16.gmra.mxu0 %v690
      %v1370 = vpop.f32.mrf.mxu0
      %v1371 = vadd.f32 %v1219, %v1370
      %v1372 = vpop.f32.mrf.mxu0
      %v1373 = vpop.f32.mrf.mxu0
      %v1374 = vadd.f32 %v1222, %v1373
      %v1375 = vpop.f32.mrf.mxu0
      %1376 = vmatprep.mubr.bf16.mxu0 %v594
      %1377 = vmatmul.mubr.bf16.gmra.mxu0 %v691
      %v1378 = vpop.f32.mrf.mxu0
      %v1379 = vadd.f32 %v1227, %v1378
      %v1380 = vpop.f32.mrf.mxu0
      %v1381 = vpop.f32.mrf.mxu0
      %v1382 = vadd.f32 %v1230, %v1381
      %v1383 = vpop.f32.mrf.mxu0
      %1384 = vmatprep.mubr.bf16.mxu0 %v597
      %1385 = vmatmul.mubr.bf16.gmra.mxu0 %v692
      %v1386 = vpop.f32.mrf.mxu0
      %v1387 = vadd.f32 %v1235, %v1386
      %v1388 = vpop.f32.mrf.mxu0
      %v1389 = vpop.f32.mrf.mxu0
      %v1390 = vadd.f32 %v1238, %v1389
      %v1391 = vpop.f32.mrf.mxu0
      %1392 = vmatprep.mubr.bf16.mxu0 %v601
      %1393 = vmatmul.mubr.bf16.gmra.mxu0 %v693
      %v1394 = vpop.f32.mrf.mxu0
      %v1395 = vadd.f32 %v1243, %v1394
      %v1396 = vpop.f32.mrf.mxu0
      %v1397 = vpop.f32.mrf.mxu0
      %v1398 = vpop.f32.mrf.mxu0
      %1399 = vdwg.mxu0
      %1400 = vmatprep.subr.bf16.mxu0 0
      %1401 = vmatpush1.bf16.msra.mxu0 0
      %1402 = vmatprep.subr.bf16.mxu0 0
      %1403 = vmatpush1.bf16.msra.mxu0 0
      %1404 = vmatprep.subr.bf16.mxu0 0
      %1405 = vmatpush1.bf16.msra.mxu0 0
      %1406 = vmatprep.subr.bf16.mxu0 0
      %1407 = vmatpush1.bf16.msra.mxu0 0
      %1408 = vmatprep.subr.bf16.mxu0 0
      %1409 = vmatpush1.bf16.msra.mxu0 %v1027
      %1410 = vmatprep.subr.bf16.mxu0 0
      %1411 = vmatpush1.bf16.msra.mxu0 %v1026
      %1412 = vmatprep.subr.bf16.mxu0 0
      %1413 = vmatpush1.bf16.msra.mxu0 %v1025
      %1414 = vmatprep.subr.bf16.mxu0 0
      %1415 = vmatpush1.bf16.msra.mxu0 %v1024
      %1416 = vmatprep.subr.bf16.mxu0 0
      %1417 = vmatpush2.bf16.msra.mxu0 0
      %1418 = vmatprep.subr.bf16.mxu0 0
      %1419 = vmatpush2.bf16.msra.mxu0 0
      %1420 = vmatprep.subr.bf16.mxu0 0
      %1421 = vmatpush2.bf16.msra.mxu0 0
      %1422 = vmatprep.subr.bf16.mxu0 0
      %1423 = vmatpush2.bf16.msra.mxu0 0
      %1424 = vmatprep.subr.bf16.mxu0 0
      %1425 = vmatpush2.bf16.msra.mxu0 0
      %1426 = vmatprep.subr.bf16.mxu0 0
      %1427 = vmatpush2.bf16.msra.mxu0 0
      %1428 = vmatprep.subr.bf16.mxu0 0
      %1429 = vmatpush2.bf16.msra.mxu0 0
      %1430 = vmatprep.subr.bf16.mxu0 0
      %1431 = vmatpush2.bf16.msra.mxu0 0
      %1432 = vmatprep.mubr.bf16.mxu0 0
      %1433 = vmatmul.mubr.bf16.gmra.mxu0 %v1064
      %v1434 = vpop.f32.mrf.mxu0
      %v1435 = vadd.f32 %v1283, %v1434
      %v1436 = vpop.f32.mrf.mxu0
      %v1437 = vpop.f32.mrf.mxu0
      %v1438 = vadd.f32 %v1286, %v1437
      %v1439 = vpop.f32.mrf.mxu0
      %1440 = vmatprep.mubr.bf16.mxu0 0
      %1441 = vmatmul.mubr.bf16.gmra.mxu0 %v1066
      %v1442 = vpop.f32.mrf.mxu0
      %v1443 = vadd.f32 %v1291, %v1442
      %v1444 = vpop.f32.mrf.mxu0
      %v1445 = vpop.f32.mrf.mxu0
      %v1446 = vadd.f32 %v1294, %v1445
      %v1447 = vpop.f32.mrf.mxu0
      %1448 = vmatprep.mubr.bf16.mxu0 0
      %1449 = vmatmul.mubr.bf16.gmra.mxu0 %v1068
      %v1450 = vpop.f32.mrf.mxu0
      %v1451 = vadd.f32 %v1299, %v1450
      %v1452 = vpop.f32.mrf.mxu0
      %v1453 = vpop.f32.mrf.mxu0
      %v1454 = vadd.f32 %v1302, %v1453
      %v1455 = vpop.f32.mrf.mxu0
      %1456 = vmatprep.mubr.bf16.mxu0 0
      %1457 = vmatmul.mubr.bf16.gmra.mxu0 %v1070
      %v1458 = vpop.f32.mrf.mxu0
      %v1459 = vadd.f32 %v1307, %v1458
      %v1460 = vpop.f32.mrf.mxu0
      %v1461 = vpop.f32.mrf.mxu0
      %v1462 = vadd.f32 %v1310, %v1461
      %v1463 = vpop.f32.mrf.mxu0
      %1464 = vmatprep.mubr.bf16.mxu0 0
      %1465 = vmatmul.mubr.bf16.gmra.mxu0 %v1072
      %v1466 = vpop.f32.mrf.mxu0
      %v1467 = vadd.f32 %v1315, %v1466
      %v1468 = vpop.f32.mrf.mxu0
      %v1469 = vpop.f32.mrf.mxu0
      %v1470 = vadd.f32 %v1318, %v1469
      %v1471 = vpop.f32.mrf.mxu0
      %1472 = vmatprep.mubr.bf16.mxu0 0
      %1473 = vmatmul.mubr.bf16.gmra.mxu0 %v1074
      %v1474 = vpop.f32.mrf.mxu0
      %v1475 = vadd.f32 %v1323, %v1474
      %v1476 = vpop.f32.mrf.mxu0
      %v1477 = vpop.f32.mrf.mxu0
      %v1478 = vadd.f32 %v1326, %v1477
      %v1479 = vpop.f32.mrf.mxu0
      %1480 = vmatprep.mubr.bf16.mxu0 0
      %1481 = vmatmul.mubr.bf16.gmra.mxu0 %v1076
      %v1482 = vpop.f32.mrf.mxu0
      %v1483 = vadd.f32 %v1331, %v1482
      %v1484 = vpop.f32.mrf.mxu0
      %v1485 = vpop.f32.mrf.mxu0
      %v1486 = vadd.f32 %v1334, %v1485
      %v1487 = vpop.f32.mrf.mxu0
      %1488 = vmatprep.mubr.bf16.mxu0 0
      %1489 = vmatmul.mubr.bf16.gmra.mxu0 %v1078
      %v1490 = vpop.f32.mrf.mxu0
      %v1491 = vadd.f32 %v1339, %v1490
      %v1492 = vpop.f32.mrf.mxu0
      %v1493 = vpop.f32.mrf.mxu0
      %v1494 = vadd.f32 %v1342, %v1493
      %v1495 = vpop.f32.mrf.mxu0
      %1496 = vmatprep.mubr.bf16.mxu0 0
      %1497 = vmatmul.mubr.bf16.gmra.mxu0 %v1080
      %v1498 = vpop.f32.mrf.mxu0
      %v1499 = vadd.f32 %v1347, %v1498
      %v1500 = vpop.f32.mrf.mxu0
      %v1501 = vpop.f32.mrf.mxu0
      %v1502 = vadd.f32 %v1350, %v1501
      %v1503 = vpop.f32.mrf.mxu0
      %1504 = vmatprep.mubr.bf16.mxu0 0
      %1505 = vmatmul.mubr.bf16.gmra.mxu0 %v1082
      %v1506 = vpop.f32.mrf.mxu0
      %v1507 = vadd.f32 %v1355, %v1506
      %v1508 = vpop.f32.mrf.mxu0
      %v1509 = vpop.f32.mrf.mxu0
      %v1510 = vadd.f32 %v1358, %v1509
      %v1511 = vpop.f32.mrf.mxu0
      %1512 = vmatprep.mubr.bf16.mxu0 0
      %1513 = vmatmul.mubr.bf16.gmra.mxu0 %v1084
      %v1514 = vpop.f32.mrf.mxu0
      %v1515 = vadd.f32 %v1363, %v1514
      %v1516 = vpop.f32.mrf.mxu0
      %v1517 = vpop.f32.mrf.mxu0
      %v1518 = vadd.f32 %v1366, %v1517
      %v1519 = vpop.f32.mrf.mxu0
      %1520 = vmatprep.mubr.bf16.mxu0 0
      %1521 = vmatmul.mubr.bf16.gmra.mxu0 %v1086
      %v1522 = vpop.f32.mrf.mxu0
      %v1523 = vadd.f32 %v1371, %v1522
      %v1524 = vpop.f32.mrf.mxu0
      %v1525 = vpop.f32.mrf.mxu0
      %v1526 = vadd.f32 %v1374, %v1525
      %v1527 = vpop.f32.mrf.mxu0
      %1528 = vmatprep.mubr.bf16.mxu0 0
      %1529 = vmatmul.mubr.bf16.gmra.mxu0 %v1088
      %v1530 = vpop.f32.mrf.mxu0
      %v1531 = vadd.f32 %v1379, %v1530
      %v1532 = vpop.f32.mrf.mxu0
      %v1533 = vpop.f32.mrf.mxu0
      %v1534 = vadd.f32 %v1382, %v1533
      %v1535 = vpop.f32.mrf.mxu0
      %1536 = vmatprep.mubr.bf16.mxu0 0
      %1537 = vmatmul.mubr.bf16.gmra.mxu0 %v1091
      %v1538 = vpop.f32.mrf.mxu0
      %v1539 = vadd.f32 %v1387, %v1538
      %v1540 = vpop.f32.mrf.mxu0
      %v1541 = vpop.f32.mrf.mxu0
      %v1542 = vadd.f32 %v1390, %v1541
      %v1543 = vpop.f32.mrf.mxu0
      %1544 = vmatprep.mubr.bf16.mxu0 0
      %1545 = vmatmul.mubr.bf16.gmra.mxu0 %v1094
      %v1546 = vpop.f32.mrf.mxu0
      %v1547 = vadd.f32 %v1395, %v1546
      %v1548 = vpop.f32.mrf.mxu0
      %v1549 = vpop.f32.mrf.mxu0
      %v1550 = vpop.f32.mrf.mxu0
      %1551 = vdwg.mxu0
      %v1552 = vmax.f32 %v1435, 0.0
      %v1553 = vmax.f32 %v1438, 0.0
      %v1554 = vmax.f32 %v1443, 0.0
      %v1555 = vmax.f32 %v1446, 0.0
      %v1556 = vmax.f32 %v1451, 0.0
      %v1557 = vmax.f32 %v1454, 0.0
      %v1558 = vmax.f32 %v1459, 0.0
      %v1559 = vmax.f32 %v1462, 0.0
      %v1560 = vmax.f32 %v1467, 0.0
      %v1561 = vmax.f32 %v1470, 0.0
      %v1562 = vmax.f32 %v1475, 0.0
      %v1563 = vmax.f32 %v1478, 0.0
      %v1564 = vmax.f32 %v1483, 0.0
      %v1565 = vmax.f32 %v1486, 0.0
      %v1566 = vmax.f32 %v1491, 0.0
      %v1567 = vmax.f32 %v1494, 0.0
      %v1568 = vmax.f32 %v1499, 0.0
      %v1569 = vmax.f32 %v1502, 0.0
      %v1570 = vmax.f32 %v1507, 0.0
      %v1571 = vmax.f32 %v1510, 0.0
      %v1572 = vmax.f32 %v1515, 0.0
      %v1573 = vmax.f32 %v1518, 0.0
      %v1574 = vmax.f32 %v1523, 0.0
      %v1575 = vmax.f32 %v1526, 0.0
      %v1576 = vmax.f32 %v1531, 0.0
      %v1577 = vmax.f32 %v1534, 0.0
      %v1578 = vmax.f32 %v1539, 0.0
      %v1579 = vmax.f32 %v1542, 0.0
      %v1580 = vmax.f32 %v1547, 0.0
      %v1581 = vpack.c.bf16 %v1553, %v1552
      %v1582 = vpack.c.bf16 %v1555, %v1554
      %v1583 = vpack.c.bf16 %v1557, %v1556
      %v1584 = vpack.c.bf16 %v1559, %v1558
      %v1585 = vpack.c.bf16 %v1561, %v1560
      %v1586 = vpack.c.bf16 %v1563, %v1562
      %v1587 = vpack.c.bf16 %v1565, %v1564
      %v1588 = vpack.c.bf16 %v1567, %v1566
      %v1589 = vpack.c.bf16 %v1569, %v1568
      %v1590 = vpack.c.bf16 %v1571, %v1570
      %v1591 = vpack.c.bf16 %v1573, %v1572
      %v1592 = vpack.c.bf16 %v1575, %v1574
      %v1593 = vpack.c.bf16 %v1577, %v1576
      %v1594 = vpack.c.bf16 %v1579, %v1578
      %v1595 = vpack.c.bf16 %v1580, %v1580
      %v1597 = vshrl.u32 %v1581, 16
      %v1599 = vshll.u32 %v1581, 16
      %v1601 = vrot.slane %v1599, 1
      %v1602 = vor.u32 %v1597, %v1601
      %v1604 = vshll.u32 %v1582, 16
      %v1606 = vrot.slane %v1604, 1
      %v1607 = vsel %vm346, %v1602, %v1606
      %v1608 = vshrl.u32 %v1582, 16
      %v1610 = vor.u32 %v1608, %v1606
      %v1612 = vshll.u32 %v1583, 16
      %v1614 = vrot.slane %v1612, 1
      %v1615 = vsel %vm346, %v1610, %v1614
      %v1616 = vshrl.u32 %v1583, 16
      %v1618 = vor.u32 %v1616, %v1614
      %v1620 = vshll.u32 %v1584, 16
      %v1622 = vrot.slane %v1620, 1
      %v1623 = vsel %vm346, %v1618, %v1622
      %v1624 = vshrl.u32 %v1584, 16
      %v1626 = vor.u32 %v1624, %v1622
      %v1628 = vshll.u32 %v1585, 16
      %v1630 = vrot.slane %v1628, 1
      %v1631 = vsel %vm346, %v1626, %v1630
      %v1632 = vshrl.u32 %v1585, 16
      %v1634 = vor.u32 %v1632, %v1630
      %v1636 = vshll.u32 %v1586, 16
      %v1638 = vrot.slane %v1636, 1
      %v1639 = vsel %vm346, %v1634, %v1638
      %v1640 = vshrl.u32 %v1586, 16
      %v1642 = vor.u32 %v1640, %v1638
      %v1644 = vshll.u32 %v1587, 16
      %v1646 = vrot.slane %v1644, 1
      %v1647 = vsel %vm346, %v1642, %v1646
      %v1648 = vshrl.u32 %v1587, 16
      %v1650 = vor.u32 %v1648, %v1646
      %v1652 = vshll.u32 %v1588, 16
      %v1654 = vrot.slane %v1652, 1
      %v1655 = vsel %vm346, %v1650, %v1654
      %v1656 = vshrl.u32 %v1588, 16
      %v1658 = vor.u32 %v1656, %v1654
      %v1660 = vshll.u32 %v1589, 16
      %v1662 = vrot.slane %v1660, 1
      %v1663 = vsel %vm346, %v1658, %v1662
      %v1664 = vshrl.u32 %v1589, 16
      %v1666 = vor.u32 %v1664, %v1662
      %v1668 = vshll.u32 %v1590, 16
      %v1670 = vrot.slane %v1668, 1
      %v1671 = vsel %vm346, %v1666, %v1670
      %v1672 = vshrl.u32 %v1590, 16
      %v1674 = vor.u32 %v1672, %v1670
      %v1676 = vshll.u32 %v1591, 16
      %v1678 = vrot.slane %v1676, 1
      %v1679 = vsel %vm346, %v1674, %v1678
      %v1680 = vshrl.u32 %v1591, 16
      %v1682 = vor.u32 %v1680, %v1678
      %v1684 = vshll.u32 %v1592, 16
      %v1686 = vrot.slane %v1684, 1
      %v1687 = vsel %vm346, %v1682, %v1686
      %v1688 = vshrl.u32 %v1592, 16
      %v1690 = vor.u32 %v1688, %v1686
      %v1692 = vshll.u32 %v1593, 16
      %v1694 = vrot.slane %v1692, 1
      %v1695 = vsel %vm346, %v1690, %v1694
      %v1696 = vshrl.u32 %v1593, 16
      %v1698 = vor.u32 %v1696, %v1694
      %v1700 = vshll.u32 %v1594, 16
      %v1702 = vrot.slane %v1700, 1
      %v1703 = vsel %vm346, %v1698, %v1702
      %v1704 = vshrl.u32 %v1594, 16
      %v1706 = vor.u32 %v1704, %v1702
      %v1708 = vshll.u32 %v1595, 16
      %v1710 = vrot.slane %v1708, 1
      %v1711 = vsel %vm346, %v1706, %v1710
      %1712 = vrot.lane.b32.xlu0 %v1607, 32
      %v1713 = vpop.permute.xlu0 %1712
      %1714 = vrot.lane.b32.xlu0 %v1615, 32
      %v1715 = vpop.permute.xlu0 %1714
      %1716 = vrot.lane.b32.xlu0 %v1623, 32
      %v1717 = vpop.permute.xlu0 %1716
      %1718 = vrot.lane.b32.xlu0 %v1631, 32
      %v1719 = vpop.permute.xlu0 %1718
      %1720 = vrot.lane.b32.xlu0 %v1639, 32
      %v1721 = vpop.permute.xlu0 %1720
      %1722 = vrot.lane.b32.xlu0 %v1647, 32
      %v1723 = vpop.permute.xlu0 %1722
      %1724 = vrot.lane.b32.xlu0 %v1655, 32
      %v1725 = vpop.permute.xlu0 %1724
      %1726 = vrot.lane.b32.xlu0 %v1663, 32
      %v1727 = vpop.permute.xlu0 %1726
      %1728 = vrot.lane.b32.xlu0 %v1671, 32
      %v1729 = vpop.permute.xlu0 %1728
      %1730 = vrot.lane.b32.xlu0 %v1679, 32
      %v1731 = vpop.permute.xlu0 %1730
      %1732 = vrot.lane.b32.xlu0 %v1687, 32
      %v1733 = vpop.permute.xlu0 %1732
      %1734 = vrot.lane.b32.xlu0 %v1695, 32
      %v1735 = vpop.permute.xlu0 %1734
      %1736 = vrot.lane.b32.xlu0 %v1703, 32
      %v1737 = vpop.permute.xlu0 %1736
      %1738 = vrot.lane.b32.xlu0 %v1711, 32
      %v1739 = vpop.permute.xlu0 %1738
      %v1755 = vrot.slane %v1581, 1
      %v1756 = vrot.slane %v1582, 1
      %v1757 = vsel %vm516, %v1755, %v1756
      %v1758 = vrot.slane %v1583, 1
      %v1759 = vsel %vm516, %v1756, %v1758
      %v1760 = vrot.slane %v1584, 1
      %v1761 = vsel %vm516, %v1758, %v1760
      %v1762 = vrot.slane %v1585, 1
      %v1763 = vsel %vm516, %v1760, %v1762
      %v1764 = vrot.slane %v1586, 1
      %v1765 = vsel %vm516, %v1762, %v1764
      %v1766 = vrot.slane %v1587, 1
      %v1767 = vsel %vm516, %v1764, %v1766
      %v1768 = vrot.slane %v1588, 1
      %v1769 = vsel %vm516, %v1766, %v1768
      %v1770 = vrot.slane %v1589, 1
      %v1771 = vsel %vm516, %v1768, %v1770
      %v1772 = vrot.slane %v1590, 1
      %v1773 = vsel %vm516, %v1770, %v1772
      %v1774 = vrot.slane %v1591, 1
      %v1775 = vsel %vm516, %v1772, %v1774
      %v1776 = vrot.slane %v1592, 1
      %v1777 = vsel %vm516, %v1774, %v1776
      %v1778 = vrot.slane %v1593, 1
      %v1779 = vsel %vm516, %v1776, %v1778
      %v1780 = vrot.slane %v1594, 1
      %v1781 = vsel %vm516, %v1778, %v1780
      %v1782 = vrot.slane %v1595, 1
      %v1783 = vsel %vm516, %v1780, %v1782
      %1784 = vrot.lane.b32.xlu0 %v1757, 64
      %v1785 = vpop.permute.xlu0 %1784
      %1786 = vrot.lane.b32.xlu0 %v1759, 64
      %v1787 = vpop.permute.xlu0 %1786
      %1788 = vrot.lane.b32.xlu0 %v1761, 64
      %v1789 = vpop.permute.xlu0 %1788
      %1790 = vrot.lane.b32.xlu0 %v1763, 64
      %v1791 = vpop.permute.xlu0 %1790
      %1792 = vrot.lane.b32.xlu0 %v1765, 64
      %v1793 = vpop.permute.xlu0 %1792
      %1794 = vrot.lane.b32.xlu0 %v1767, 64
      %v1795 = vpop.permute.xlu0 %1794
      %1796 = vrot.lane.b32.xlu0 %v1769, 64
      %v1797 = vpop.permute.xlu0 %1796
      %1798 = vrot.lane.b32.xlu0 %v1771, 64
      %v1799 = vpop.permute.xlu0 %1798
      %1800 = vrot.lane.b32.xlu0 %v1773, 64
      %v1801 = vpop.permute.xlu0 %1800
      %1802 = vrot.lane.b32.xlu0 %v1775, 64
      %v1803 = vpop.permute.xlu0 %1802
      %1804 = vrot.lane.b32.xlu0 %v1777, 64
      %v1805 = vpop.permute.xlu0 %1804
      %1806 = vrot.lane.b32.xlu0 %v1779, 64
      %v1807 = vpop.permute.xlu0 %1806
      %1808 = vrot.lane.b32.xlu0 %v1781, 64
      %v1809 = vpop.permute.xlu0 %1808
      %1810 = vrot.lane.b32.xlu0 %v1783, 64
      %v1811 = vpop.permute.xlu0 %1810
      %vm1812 = vcmask 261120
      %v1814 = vsel %vm1812, %v1581, %v1713
      %v1816 = vsel %vm1812, %v1582, %v1715
      %v1818 = vsel %vm1812, %v1583, %v1717
      %v1820 = vsel %vm1812, %v1584, %v1719
      %v1822 = vsel %vm1812, %v1585, %v1721
      %v1824 = vsel %vm1812, %v1586, %v1723
      %v1826 = vsel %vm1812, %v1587, %v1725
      %v1828 = vsel %vm1812, %v1588, %v1727
      %v1830 = vsel %vm1812, %v1589, %v1729
      %v1832 = vsel %vm1812, %v1590, %v1731
      %v1834 = vsel %vm1812, %v1591, %v1733
      %v1836 = vsel %vm1812, %v1592, %v1735
      %v1838 = vsel %vm1812, %v1593, %v1737
      %v1840 = vsel %vm1812, %v1594, %v1739
      %v1842 = vsel %vm550, %v1814, %v1785
      %v1844 = vsel %vm550, %v1816, %v1787
      %v1846 = vsel %vm550, %v1818, %v1789
      %v1848 = vsel %vm550, %v1820, %v1791
      %v1850 = vsel %vm550, %v1822, %v1793
      %v1852 = vsel %vm550, %v1824, %v1795
      %v1854 = vsel %vm550, %v1826, %v1797
      %v1856 = vsel %vm550, %v1828, %v1799
      %v1858 = vsel %vm550, %v1830, %v1801
      %v1860 = vsel %vm550, %v1832, %v1803
      %v1862 = vsel %vm550, %v1834, %v1805
      %v1864 = vsel %vm550, %v1836, %v1807
      %v1866 = vsel %vm550, %v1838, %v1809
      %v1868 = vsel %vm550, %v1840, %v1811
      %1881 = vrot.lane.b32.xlu0 %v1844, 96
      %v1882 = vpop.permute.xlu0 %1881
      %1883 = vrot.lane.b32.xlu0 %v1846, 96
      %v1884 = vpop.permute.xlu0 %1883
      %1885 = vrot.lane.b32.xlu0 %v1848, 96
      %v1886 = vpop.permute.xlu0 %1885
      %1887 = vrot.lane.b32.xlu0 %v1850, 96
      %v1888 = vpop.permute.xlu0 %1887
      %1889 = vrot.lane.b32.xlu0 %v1852, 96
      %v1890 = vpop.permute.xlu0 %1889
      %1891 = vrot.lane.b32.xlu0 %v1854, 96
      %v1892 = vpop.permute.xlu0 %1891
      %1893 = vrot.lane.b32.xlu0 %v1856, 96
      %v1894 = vpop.permute.xlu0 %1893
      %1895 = vrot.lane.b32.xlu0 %v1858, 96
      %v1896 = vpop.permute.xlu0 %1895
      %1897 = vrot.lane.b32.xlu0 %v1860, 96
      %v1898 = vpop.permute.xlu0 %1897
      %1899 = vrot.lane.b32.xlu0 %v1862, 96
      %v1900 = vpop.permute.xlu0 %1899
      %1901 = vrot.lane.b32.xlu0 %v1864, 96
      %v1902 = vpop.permute.xlu0 %1901
      %1903 = vrot.lane.b32.xlu0 %v1866, 96
      %v1904 = vpop.permute.xlu0 %1903
      %1906 = vrot.lane.b32.xlu0 %v1846, 64
      %v1907 = vpop.permute.xlu0 %1906
      %1908 = vrot.lane.b32.xlu0 %v1848, 64
      %v1909 = vpop.permute.xlu0 %1908
      %1910 = vrot.lane.b32.xlu0 %v1850, 64
      %v1911 = vpop.permute.xlu0 %1910
      %1912 = vrot.lane.b32.xlu0 %v1852, 64
      %v1913 = vpop.permute.xlu0 %1912
      %1914 = vrot.lane.b32.xlu0 %v1854, 64
      %v1915 = vpop.permute.xlu0 %1914
      %1916 = vrot.lane.b32.xlu0 %v1856, 64
      %v1917 = vpop.permute.xlu0 %1916
      %1918 = vrot.lane.b32.xlu0 %v1858, 64
      %v1919 = vpop.permute.xlu0 %1918
      %1920 = vrot.lane.b32.xlu0 %v1860, 64
      %v1921 = vpop.permute.xlu0 %1920
      %1922 = vrot.lane.b32.xlu0 %v1862, 64
      %v1923 = vpop.permute.xlu0 %1922
      %1924 = vrot.lane.b32.xlu0 %v1864, 64
      %v1925 = vpop.permute.xlu0 %1924
      %1926 = vrot.lane.b32.xlu0 %v1866, 64
      %v1927 = vpop.permute.xlu0 %1926
      %1928 = vrot.lane.b32.xlu0 %v1868, 64
      %v1929 = vpop.permute.xlu0 %1928
      %vm1930 = vcmask 785408
      %v1932 = vsel %vm1930, %v1842, %v1882
      %v1935 = vsel %vm1930, %v1844, %v1884
      %v1938 = vsel %vm1930, %v1846, %v1886
      %v1941 = vsel %vm1930, %v1848, %v1888
      %v1944 = vsel %vm1930, %v1850, %v1890
      %v1947 = vsel %vm1930, %v1852, %v1892
      %v1950 = vsel %vm1930, %v1854, %v1894
      %v1953 = vsel %vm1930, %v1856, %v1896
      %v1956 = vsel %vm1930, %v1858, %v1898
      %v1959 = vsel %vm1930, %v1860, %v1900
      %v1962 = vsel %vm1930, %v1862, %v1902
      %v1965 = vsel %vm1930, %v1864, %v1904
      %v1968 = vsel %vm550, %v1882, %v1907
      %v1971 = vsel %vm550, %v1884, %v1909
      %v1974 = vsel %vm550, %v1886, %v1911
      %v1977 = vsel %vm550, %v1888, %v1913
      %v1980 = vsel %vm550, %v1890, %v1915
      %v1983 = vsel %vm550, %v1892, %v1917
      %v1986 = vsel %vm550, %v1894, %v1919
      %v1989 = vsel %vm550, %v1896, %v1921
      %v1992 = vsel %vm550, %v1898, %v1923
      %v1995 = vsel %vm550, %v1900, %v1925
      %v1998 = vsel %vm550, %v1902, %v1927
      %v2001 = vsel %vm550, %v1904, %v1929
      %v2003 = vld [vmem:[%s3] sm:$0xf]
      %v2004 = vld [vmem:[%s3 + $0x4] sm:$0xf]
      %v2005 = vld [vmem:[%s3 + $0x8] sm:$0xf]
      %v2006 = vld [vmem:[%s3 + $0xc] sm:$0xf]
      %v2007 = vld [vmem:[%s3 + $0x10] sm:$0xf]
      %v2008 = vld [vmem:[%s3 + $0x14] sm:$0xf]
      %v2009 = vld [vmem:[%s3 + $0x18] sm:$0xf]
      %v2010 = vld [vmem:[%s3 + $0x1c] sm:$0xf]
      %v2011 = vld [vmem:[%s3 + $0x20] sm:$0xf]
      %v2012 = vld [vmem:[%s3 + $0x24] sm:$0xf]
      %v2013 = vld [vmem:[%s3 + $0x28] sm:$0xf]
      %v2014 = vld [vmem:[%s3 + $0x2c] sm:$0xf]
      %v2015 = vld [vmem:[%s3 + $0x30] sm:$0xf]
      %v2016 = vld [vmem:[%s3 + $0x34] sm:$0xf]
      %v2017 = vld [vmem:[%s3 + $0x38] sm:$0xf]
      %v2018 = vld [vmem:[%s3 + $0x3c] sm:$0xf]
      %v2019 = vld [vmem:[%s3 + $0x40] sm:$0xf]
      %v2020 = vld [vmem:[%s3 + $0x44] sm:$0xf]
      %v2021 = vld [vmem:[%s3 + $0x48] sm:$0xf]
      %v2022 = vld [vmem:[%s3 + $0x4c] sm:$0xf]
      %v2023 = vld [vmem:[%s3 + $0x50] sm:$0xf]
      %v2024 = vld [vmem:[%s3 + $0x54] sm:$0xf]
      %v2025 = vld [vmem:[%s3 + $0x58] sm:$0xf]
      %v2026 = vld [vmem:[%s3 + $0x5c] sm:$0xf]
      %v2027 = vld [vmem:[%s3 + $0x60] sm:$0xf]
      %v2028 = vld [vmem:[%s3 + $0x64] sm:$0xf]
      %v2029 = vld [vmem:[%s3 + $0x68] sm:$0xf]
      %v2030 = vld [vmem:[%s3 + $0x6c] sm:$0xf]
      %v2031 = vld [vmem:[%s3 + $0x70] sm:$0xf]
      %v2032 = vld [vmem:[%s3 + $0x74] sm:$0xf]
      %v2033 = vld [vmem:[%s3 + $0x78] sm:$0xf]
      %v2034 = vld [vmem:[%s3 + $0x7c] sm:$0xf]
      %v2035 = vld [vmem:[%s3 + $0x80] sm:$0xf]
      %v2036 = vld [vmem:[%s3 + $0x84] sm:$0xf]
      %v2037 = vld [vmem:[%s3 + $0x88] sm:$0xf]
      %v2038 = vld [vmem:[%s3 + $0x8c] sm:$0xf]
      %v2039 = vld [vmem:[%s4] sm:$0x1]
      %v2041 = vlaneseq
      %v2042 = vshrl.u32 %v2041, 7
      %v2043 = vsub.s32 0, %v2042
      %v2044 = vrot.slane %v2039, %v2043
      %v2082 = vunpack.c.l.b16 %v2003
      %v2083 = vunpack.c.l.b16 %v2004
      %v2084 = vunpack.c.l.b16 %v2005
      %v2085 = vunpack.c.l.b16 %v2006
      %v2086 = vunpack.c.l.b16 %v2007
      %v2087 = vunpack.c.l.b16 %v2008
      %v2088 = vunpack.c.l.b16 %v2009
      %v2089 = vunpack.c.l.b16 %v2010
      %v2090 = vunpack.c.l.b16 %v2011
      %v2091 = vunpack.c.l.b16 %v2012
      %v2092 = vunpack.c.l.b16 %v2013
      %v2093 = vunpack.c.l.b16 %v2014
      %v2094 = vunpack.c.l.b16 %v2015
      %v2095 = vunpack.c.l.b16 %v2016
      %v2096 = vunpack.c.l.b16 %v2017
      %v2097 = vunpack.c.l.b16 %v2018
      %v2098 = vunpack.c.l.b16 %v2019
      %v2099 = vunpack.c.l.b16 %v2020
      %v2100 = vunpack.c.l.b16 %v2021
      %v2101 = vunpack.c.l.b16 %v2022
      %v2102 = vunpack.c.l.b16 %v2023
      %v2103 = vunpack.c.l.b16 %v2024
      %v2104 = vunpack.c.l.b16 %v2025
      %v2105 = vunpack.c.l.b16 %v2026
      %v2106 = vunpack.c.l.b16 %v2027
      %v2107 = vunpack.c.l.b16 %v2028
      %v2108 = vunpack.c.l.b16 %v2029
      %v2109 = vunpack.c.l.b16 %v2030
      %v2110 = vunpack.c.l.b16 %v2031
      %v2111 = vunpack.c.l.b16 %v2032
      %v2112 = vunpack.c.l.b16 %v2033
      %v2113 = vunpack.c.l.b16 %v2034
      %v2114 = vunpack.c.l.b16 %v2035
      %v2115 = vunpack.c.l.b16 %v2036
      %v2116 = vunpack.c.l.b16 %v2037
      %v2117 = vunpack.c.l.b16 %v2038
      %v2118 = vpack.c.b16 %v2083, %v2082
      %v2119 = vpack.c.b16 %v2085, %v2084
      %v2120 = vpack.c.b16 %v2087, %v2086
      %v2121 = vpack.c.b16 %v2089, %v2088
      %v2122 = vpack.c.b16 %v2091, %v2090
      %v2123 = vpack.c.b16 %v2093, %v2092
      %v2124 = vpack.c.b16 %v2095, %v2094
      %v2125 = vpack.c.b16 %v2097, %v2096
      %v2126 = vpack.c.b16 %v2099, %v2098
      %v2127 = vpack.c.b16 %v2101, %v2100
      %v2128 = vpack.c.b16 %v2103, %v2102
      %v2129 = vpack.c.b16 %v2105, %v2104
      %v2130 = vpack.c.b16 %v2107, %v2106
      %v2131 = vpack.c.b16 %v2109, %v2108
      %v2132 = vpack.c.b16 %v2111, %v2110
      %v2133 = vpack.c.b16 %v2113, %v2112
      %v2134 = vpack.c.b16 %v2115, %v2114
      %v2135 = vpack.c.b16 %v2117, %v2116
      %v2154 = vsel %vm1812, %v1907, 0
      %v2156 = vsel %vm1812, %v1909, 0
      %v2158 = vsel %vm1812, %v1911, 0
      %v2160 = vsel %vm1812, %v1913, 0
      %v2162 = vsel %vm1812, %v1915, 0
      %v2164 = vsel %vm1812, %v1917, 0
      %v2166 = vsel %vm1812, %v1919, 0
      %v2168 = vsel %vm1812, %v1921, 0
      %v2170 = vsel %vm1812, %v1923, 0
      %v2172 = vsel %vm1812, %v1925, 0
      %v2174 = vsel %vm1812, %v1927, 0
      %v2176 = vsel %vm1812, %v1929, 0
      %2178 = vmatprep.subr.bf16.mxu0 0
      %2179 = vmatpush1.bf16.msra.mxu0 %v2125
      %2180 = vmatprep.subr.bf16.mxu0 0
      %2181 = vmatpush1.bf16.msra.mxu0 %v2124
      %2182 = vmatprep.subr.bf16.mxu0 0
      %2183 = vmatpush1.bf16.msra.mxu0 %v2123
      %2184 = vmatprep.subr.bf16.mxu0 0
      %2185 = vmatpush1.bf16.msra.mxu0 %v2122
      %2186 = vmatprep.subr.bf16.mxu0 0
      %2187 = vmatpush1.bf16.msra.mxu0 %v2121
      %2188 = vmatprep.subr.bf16.mxu0 0
      %2189 = vmatpush1.bf16.msra.mxu0 %v2120
      %2190 = vmatprep.subr.bf16.mxu0 0
      %2191 = vmatpush1.bf16.msra.mxu0 %v2119
      %2192 = vmatprep.subr.bf16.mxu0 0
      %2193 = vmatpush1.bf16.msra.mxu0 %v2118
      %2194 = vmatprep.subr.bf16.mxu0 0
      %2195 = vmatpush2.bf16.msra.mxu0 %v2133
      %2196 = vmatprep.subr.bf16.mxu0 0
      %2197 = vmatpush2.bf16.msra.mxu0 %v2132
      %2198 = vmatprep.subr.bf16.mxu0 0
      %2199 = vmatpush2.bf16.msra.mxu0 %v2131
      %2200 = vmatprep.subr.bf16.mxu0 0
      %2201 = vmatpush2.bf16.msra.mxu0 %v2130
      %2202 = vmatprep.subr.bf16.mxu0 0
      %2203 = vmatpush2.bf16.msra.mxu0 %v2129
      %2204 = vmatprep.subr.bf16.mxu0 0
      %2205 = vmatpush2.bf16.msra.mxu0 %v2128
      %2206 = vmatprep.subr.bf16.mxu0 0
      %2207 = vmatpush2.bf16.msra.mxu0 %v2127
      %2208 = vmatprep.subr.bf16.mxu0 0
      %2209 = vmatpush2.bf16.msra.mxu0 %v2126
      %2210 = vmatprep.mubr.bf16.mxu0 %v1968
      %2211 = vmatmul.mubr.bf16.gmra.mxu0 %v1932
      %v2212 = vpop.f32.mrf.mxu0
      %v2213 = vadd.f32 %v2044, %v2212
      %v2214 = vpop.f32.mrf.mxu0
      %v2215 = vpop.f32.mrf.mxu0
      %v2216 = vadd.f32 %v2044, %v2215
      %v2217 = vpop.f32.mrf.mxu0
      %2218 = vmatprep.mubr.bf16.mxu0 %v1971
      %2219 = vmatmul.mubr.bf16.gmra.mxu0 %v1935
      %v2220 = vpop.f32.mrf.mxu0
      %v2221 = vadd.f32 %v2044, %v2220
      %v2222 = vpop.f32.mrf.mxu0
      %v2223 = vpop.f32.mrf.mxu0
      %v2224 = vadd.f32 %v2044, %v2223
      %v2225 = vpop.f32.mrf.mxu0
      %2226 = vmatprep.mubr.bf16.mxu0 %v1974
      %2227 = vmatmul.mubr.bf16.gmra.mxu0 %v1938
      %v2228 = vpop.f32.mrf.mxu0
      %v2229 = vadd.f32 %v2044, %v2228
      %v2230 = vpop.f32.mrf.mxu0
      %v2231 = vpop.f32.mrf.mxu0
      %v2232 = vadd.f32 %v2044, %v2231
      %v2233 = vpop.f32.mrf.mxu0
      %2234 = vmatprep.mubr.bf16.mxu0 %v1977
      %2235 = vmatmul.mubr.bf16.gmra.mxu0 %v1941
      %v2236 = vpop.f32.mrf.mxu0
      %v2237 = vadd.f32 %v2044, %v2236
      %v2238 = vpop.f32.mrf.mxu0
      %v2239 = vpop.f32.mrf.mxu0
      %v2240 = vadd.f32 %v2044, %v2239
      %v2241 = vpop.f32.mrf.mxu0
      %2242 = vmatprep.mubr.bf16.mxu0 %v1980
      %2243 = vmatmul.mubr.bf16.gmra.mxu0 %v1944
      %v2244 = vpop.f32.mrf.mxu0
      %v2245 = vadd.f32 %v2044, %v2244
      %v2246 = vpop.f32.mrf.mxu0
      %v2247 = vpop.f32.mrf.mxu0
      %v2248 = vadd.f32 %v2044, %v2247
      %v2249 = vpop.f32.mrf.mxu0
      %2250 = vmatprep.mubr.bf16.mxu0 %v1983
      %2251 = vmatmul.mubr.bf16.gmra.mxu0 %v1947
      %v2252 = vpop.f32.mrf.mxu0
      %v2253 = vadd.f32 %v2044, %v2252
      %v2254 = vpop.f32.mrf.mxu0
      %v2255 = vpop.f32.mrf.mxu0
      %v2256 = vadd.f32 %v2044, %v2255
      %v2257 = vpop.f32.mrf.mxu0
      %2258 = vmatprep.mubr.bf16.mxu0 %v1986
      %2259 = vmatmul.mubr.bf16.gmra.mxu0 %v1950
      %v2260 = vpop.f32.mrf.mxu0
      %v2261 = vadd.f32 %v2044, %v2260
      %v2262 = vpop.f32.mrf.mxu0
      %v2263 = vpop.f32.mrf.mxu0
      %v2264 = vadd.f32 %v2044, %v2263
      %v2265 = vpop.f32.mrf.mxu0
      %2266 = vmatprep.mubr.bf16.mxu0 %v1989
      %2267 = vmatmul.mubr.bf16.gmra.mxu0 %v1953
      %v2268 = vpop.f32.mrf.mxu0
      %v2269 = vadd.f32 %v2044, %v2268
      %v2270 = vpop.f32.mrf.mxu0
      %v2271 = vpop.f32.mrf.mxu0
      %v2272 = vadd.f32 %v2044, %v2271
      %v2273 = vpop.f32.mrf.mxu0
      %2274 = vmatprep.mubr.bf16.mxu0 %v1992
      %2275 = vmatmul.mubr.bf16.gmra.mxu0 %v1956
      %v2276 = vpop.f32.mrf.mxu0
      %v2277 = vadd.f32 %v2044, %v2276
      %v2278 = vpop.f32.mrf.mxu0
      %v2279 = vpop.f32.mrf.mxu0
      %v2280 = vadd.f32 %v2044, %v2279
      %v2281 = vpop.f32.mrf.mxu0
      %2282 = vmatprep.mubr.bf16.mxu0 %v1995
      %2283 = vmatmul.mubr.bf16.gmra.mxu0 %v1959
      %v2284 = vpop.f32.mrf.mxu0
      %v2285 = vadd.f32 %v2044, %v2284
      %v2286 = vpop.f32.mrf.mxu0
      %v2287 = vpop.f32.mrf.mxu0
      %v2288 = vadd.f32 %v2044, %v2287
      %v2289 = vpop.f32.mrf.mxu0
      %2290 = vmatprep.mubr.bf16.mxu0 %v1998
      %2291 = vmatmul.mubr.bf16.gmra.mxu0 %v1962
      %v2292 = vpop.f32.mrf.mxu0
      %v2293 = vadd.f32 %v2044, %v2292
      %v2294 = vpop.f32.mrf.mxu0
      %v2295 = vpop.f32.mrf.mxu0
      %v2296 = vadd.f32 %v2044, %v2295
      %v2297 = vpop.f32.mrf.mxu0
      %2298 = vmatprep.mubr.bf16.mxu0 %v2001
      %2299 = vmatmul.mubr.bf16.gmra.mxu0 %v1965
      %v2300 = vpop.f32.mrf.mxu0
      %v2301 = vadd.f32 %v2044, %v2300
      %v2302 = vpop.f32.mrf.mxu0
      %v2303 = vpop.f32.mrf.mxu0
      %v2304 = vadd.f32 %v2044, %v2303
      %v2305 = vpop.f32.mrf.mxu0
      %2306 = vdwg.mxu0
      %2307 = vmatprep.subr.bf16.mxu0 0
      %2308 = vmatpush1.bf16.msra.mxu0 0
      %2309 = vmatprep.subr.bf16.mxu0 0
      %2310 = vmatpush1.bf16.msra.mxu0 0
      %2311 = vmatprep.subr.bf16.mxu0 0
      %2312 = vmatpush1.bf16.msra.mxu0 0
      %2313 = vmatprep.subr.bf16.mxu0 0
      %2314 = vmatpush1.bf16.msra.mxu0 0
      %2315 = vmatprep.subr.bf16.mxu0 0
      %2316 = vmatpush1.bf16.msra.mxu0 0
      %2317 = vmatprep.subr.bf16.mxu0 0
      %2318 = vmatpush1.bf16.msra.mxu0 0
      %2319 = vmatprep.subr.bf16.mxu0 0
      %2320 = vmatpush1.bf16.msra.mxu0 %v2135
      %2321 = vmatprep.subr.bf16.mxu0 0
      %2322 = vmatpush1.bf16.msra.mxu0 %v2134
      %2323 = vmatprep.subr.bf16.mxu0 0
      %2324 = vmatpush2.bf16.msra.mxu0 0
      %2325 = vmatprep.subr.bf16.mxu0 0
      %2326 = vmatpush2.bf16.msra.mxu0 0
      %2327 = vmatprep.subr.bf16.mxu0 0
      %2328 = vmatpush2.bf16.msra.mxu0 0
      %2329 = vmatprep.subr.bf16.mxu0 0
      %2330 = vmatpush2.bf16.msra.mxu0 0
      %2331 = vmatprep.subr.bf16.mxu0 0
      %2332 = vmatpush2.bf16.msra.mxu0 0
      %2333 = vmatprep.subr.bf16.mxu0 0
      %2334 = vmatpush2.bf16.msra.mxu0 0
      %2335 = vmatprep.subr.bf16.mxu0 0
      %2336 = vmatpush2.bf16.msra.mxu0 0
      %2337 = vmatprep.subr.bf16.mxu0 0
      %2338 = vmatpush2.bf16.msra.mxu0 0
      %2339 = vmatprep.mubr.bf16.mxu0 0
      %2340 = vmatmul.mubr.bf16.gmra.mxu0 %v2154
      %v2341 = vpop.f32.mrf.mxu0
      %v2342 = vadd.f32 %v2213, %v2341
      %v2343 = vpop.f32.mrf.mxu0
      %v2344 = vpop.f32.mrf.mxu0
      %v2345 = vadd.f32 %v2216, %v2344
      %v2346 = vpop.f32.mrf.mxu0
      %2347 = vmatprep.mubr.bf16.mxu0 0
      %2348 = vmatmul.mubr.bf16.gmra.mxu0 %v2156
      %v2349 = vpop.f32.mrf.mxu0
      %v2350 = vadd.f32 %v2221, %v2349
      %v2351 = vpop.f32.mrf.mxu0
      %v2352 = vpop.f32.mrf.mxu0
      %v2353 = vadd.f32 %v2224, %v2352
      %v2354 = vpop.f32.mrf.mxu0
      %2355 = vmatprep.mubr.bf16.mxu0 0
      %2356 = vmatmul.mubr.bf16.gmra.mxu0 %v2158
      %v2357 = vpop.f32.mrf.mxu0
      %v2358 = vadd.f32 %v2229, %v2357
      %v2359 = vpop.f32.mrf.mxu0
      %v2360 = vpop.f32.mrf.mxu0
      %v2361 = vadd.f32 %v2232, %v2360
      %v2362 = vpop.f32.mrf.mxu0
      %2363 = vmatprep.mubr.bf16.mxu0 0
      %2364 = vmatmul.mubr.bf16.gmra.mxu0 %v2160
      %v2365 = vpop.f32.mrf.mxu0
      %v2366 = vadd.f32 %v2237, %v2365
      %v2367 = vpop.f32.mrf.mxu0
      %v2368 = vpop.f32.mrf.mxu0
      %v2369 = vadd.f32 %v2240, %v2368
      %v2370 = vpop.f32.mrf.mxu0
      %2371 = vmatprep.mubr.bf16.mxu0 0
      %2372 = vmatmul.mubr.bf16.gmra.mxu0 %v2162
      %v2373 = vpop.f32.mrf.mxu0
      %v2374 = vadd.f32 %v2245, %v2373
      %v2375 = vpop.f32.mrf.mxu0
      %v2376 = vpop.f32.mrf.mxu0
      %v2377 = vadd.f32 %v2248, %v2376
      %v2378 = vpop.f32.mrf.mxu0
      %2379 = vmatprep.mubr.bf16.mxu0 0
      %2380 = vmatmul.mubr.bf16.gmra.mxu0 %v2164
      %v2381 = vpop.f32.mrf.mxu0
      %v2382 = vadd.f32 %v2253, %v2381
      %v2383 = vpop.f32.mrf.mxu0
      %v2384 = vpop.f32.mrf.mxu0
      %v2385 = vadd.f32 %v2256, %v2384
      %v2386 = vpop.f32.mrf.mxu0
      %2387 = vmatprep.mubr.bf16.mxu0 0
      %2388 = vmatmul.mubr.bf16.gmra.mxu0 %v2166
      %v2389 = vpop.f32.mrf.mxu0
      %v2390 = vadd.f32 %v2261, %v2389
      %v2391 = vpop.f32.mrf.mxu0
      %v2392 = vpop.f32.mrf.mxu0
      %v2393 = vadd.f32 %v2264, %v2392
      %v2394 = vpop.f32.mrf.mxu0
      %2395 = vmatprep.mubr.bf16.mxu0 0
      %2396 = vmatmul.mubr.bf16.gmra.mxu0 %v2168
      %v2397 = vpop.f32.mrf.mxu0
      %v2398 = vadd.f32 %v2269, %v2397
      %v2399 = vpop.f32.mrf.mxu0
      %v2400 = vpop.f32.mrf.mxu0
      %v2401 = vadd.f32 %v2272, %v2400
      %v2402 = vpop.f32.mrf.mxu0
      %2403 = vmatprep.mubr.bf16.mxu0 0
      %2404 = vmatmul.mubr.bf16.gmra.mxu0 %v2170
      %v2405 = vpop.f32.mrf.mxu0
      %v2406 = vadd.f32 %v2277, %v2405
      %v2407 = vpop.f32.mrf.mxu0
      %v2408 = vpop.f32.mrf.mxu0
      %v2409 = vadd.f32 %v2280, %v2408
      %v2410 = vpop.f32.mrf.mxu0
      %2411 = vmatprep.mubr.bf16.mxu0 0
      %2412 = vmatmul.mubr.bf16.gmra.mxu0 %v2172
      %v2413 = vpop.f32.mrf.mxu0
      %v2414 = vadd.f32 %v2285, %v2413
      %v2415 = vpop.f32.mrf.mxu0
      %v2416 = vpop.f32.mrf.mxu0
      %v2417 = vadd.f32 %v2288, %v2416
      %v2418 = vpop.f32.mrf.mxu0
      %2419 = vmatprep.mubr.bf16.mxu0 0
      %2420 = vmatmul.mubr.bf16.gmra.mxu0 %v2174
      %v2421 = vpop.f32.mrf.mxu0
      %v2422 = vadd.f32 %v2293, %v2421
      %v2423 = vpop.f32.mrf.mxu0
      %v2424 = vpop.f32.mrf.mxu0
      %v2425 = vadd.f32 %v2296, %v2424
      %v2426 = vpop.f32.mrf.mxu0
      %2427 = vmatprep.mubr.bf16.mxu0 0
      %2428 = vmatmul.mubr.bf16.gmra.mxu0 %v2176
      %v2429 = vpop.f32.mrf.mxu0
      %v2430 = vadd.f32 %v2301, %v2429
      %v2431 = vpop.f32.mrf.mxu0
      %v2432 = vpop.f32.mrf.mxu0
      %v2433 = vadd.f32 %v2304, %v2432
      %v2434 = vpop.f32.mrf.mxu0
      %2435 = vdwg.mxu0
      %v2436 = vmax.f32 %v2342, 0.0
      %v2437 = vmax.f32 %v2345, 0.0
      %v2438 = vmax.f32 %v2350, 0.0
      %v2439 = vmax.f32 %v2353, 0.0
      %v2440 = vmax.f32 %v2358, 0.0
      %v2441 = vmax.f32 %v2361, 0.0
      %v2442 = vmax.f32 %v2366, 0.0
      %v2443 = vmax.f32 %v2369, 0.0
      %v2444 = vmax.f32 %v2374, 0.0
      %v2445 = vmax.f32 %v2377, 0.0
      %v2446 = vmax.f32 %v2382, 0.0
      %v2447 = vmax.f32 %v2385, 0.0
      %v2448 = vmax.f32 %v2390, 0.0
      %v2449 = vmax.f32 %v2393, 0.0
      %v2450 = vmax.f32 %v2398, 0.0
      %v2451 = vmax.f32 %v2401, 0.0
      %v2452 = vmax.f32 %v2406, 0.0
      %v2453 = vmax.f32 %v2409, 0.0
      %v2454 = vmax.f32 %v2414, 0.0
      %v2455 = vmax.f32 %v2417, 0.0
      %v2456 = vmax.f32 %v2422, 0.0
      %v2457 = vmax.f32 %v2425, 0.0
      %v2458 = vmax.f32 %v2430, 0.0
      %v2459 = vmax.f32 %v2433, 0.0
      %2460 = vst.msk [vmem:[%s224] sm:$0xff] %vm1812, %v2436
      %2461 = vst.msk [vmem:[%s224 + $0x8] sm:$0xff] %vm1812, %v2437
      %2462 = vst.msk [vmem:[%s224 + $0x10] sm:$0xff] %vm1812, %v2438
      %2463 = vst.msk [vmem:[%s224 + $0x18] sm:$0xff] %vm1812, %v2439
      %2464 = vst.msk [vmem:[%s224 + $0x20] sm:$0xff] %vm1812, %v2440
      %2465 = vst.msk [vmem:[%s224 + $0x28] sm:$0xff] %vm1812, %v2441
      %2466 = vst.msk [vmem:[%s224 + $0x30] sm:$0xff] %vm1812, %v2442
      %2467 = vst.msk [vmem:[%s224 + $0x38] sm:$0xff] %vm1812, %v2443
      %2468 = vst.msk [vmem:[%s224 + $0x40] sm:$0xff] %vm1812, %v2444
      %2469 = vst.msk [vmem:[%s224 + $0x48] sm:$0xff] %vm1812, %v2445
      %2470 = vst.msk [vmem:[%s224 + $0x50] sm:$0xff] %vm1812, %v2446
      %2471 = vst.msk [vmem:[%s224 + $0x58] sm:$0xff] %vm1812, %v2447
      %2472 = vst.msk [vmem:[%s224 + $0x60] sm:$0xff] %vm1812, %v2448
      %2473 = vst.msk [vmem:[%s224 + $0x68] sm:$0xff] %vm1812, %v2449
      %2474 = vst.msk [vmem:[%s224 + $0x70] sm:$0xff] %vm1812, %v2450
      %2475 = vst.msk [vmem:[%s224 + $0x78] sm:$0xff] %vm1812, %v2451
      %2476 = vst.msk [vmem:[%s224 + $0x80] sm:$0xff] %vm1812, %v2452
      %2477 = vst.msk [vmem:[%s224 + $0x88] sm:$0xff] %vm1812, %v2453
      %2478 = vst.msk [vmem:[%s224 + $0x90] sm:$0xff] %vm1812, %v2454
      %2479 = vst.msk [vmem:[%s224 + $0x98] sm:$0xff] %vm1812, %v2455
      %2480 = vst.msk [vmem:[%s224 + $0xa0] sm:$0xff] %vm1812, %v2456
      %2481 = vst.msk [vmem:[%s224 + $0xa8] sm:$0xff] %vm1812, %v2457
      %2482 = vst.msk [vmem:[%s224 + $0xb0] sm:$0xff] %vm1812, %v2458
      %2483 = vst.msk [vmem:[%s224 + $0xb8] sm:$0xff] %vm1812, %v2459
      %p2484 = scmp.lt.s32.totalorder %s16, 1
      %s2485 = scalar_select %p2484, %s16, 1
      %s2486 = smul.addr %s2485, 24
      %s2487 = smul.addr %s2486, 8
      %s2488 = scalar_lea.vmem %s5, %s2487
      // Predicated region
      $region41: #{upconv_forward.1} parent=39 // pred_check
        %p2489 = pneg %p144
      $region42: #{upconv_forward.1} parent=39 // pred_check_branch
        %2491 = sbr.rel (%p2489) target = $region44
      $region43: #{upconv_forward.1} parent=39 // pred_region
        _
      $region44: #{upconv_forward.1} parent=39 // pred_fallthru
        _
    $region40: #{upconv_forward.1} parent=5 // pred_fallthru
      _
    %p2492 = scmp.le.s32.totalorder 2, %s11
    // Predicated region
    $region45: #{upconv_forward.1} parent=5 // pred_check
      %p2493 = pneg %p2492
    $region46: #{upconv_forward.1} parent=5 // pred_check_branch
      %2495 = sbr.rel (%p2493) target = $region48
    $region47: #{upconv_forward.1} parent=5 // pred_region
      %s2496 = ssub.s32 %s11, 2
      // Predicated region
      $region49: #{upconv_forward.1} parent=47 // pred_check
        %p2497 = pneg %p150
      $region50: #{upconv_forward.1} parent=47 // pred_check_branch
        %2499 = sbr.rel (%p2497) target = $region52
      $region51: #{upconv_forward.1} parent=47 // pred_region
        %p2500 = scmp.lt.s32.totalorder %s17, 1
        %s2501 = scalar_select %p2500, %s17, 1
        %s2502 = smul.addr %s2501, 24
        %s2503 = smul.addr %s2502, 8
        %s2504 = scalar_lea.vmem %s5, %s2503
      $region52: #{upconv_forward.1} parent=47 // pred_fallthru
        _
    $region48: #{upconv_forward.1} parent=5 // pred_fallthru
      _
  $region6: #{upconv_forward.1} parent=0 // loop_footer
    %s15 = sadd.s32 1, %s11
  $region7: #{upconv_forward.1} parent=0 // loop_footer_branch
    %10 = sbr.rel target = $region3
  $region8: #{upconv_forward.1} parent=0 // loop_exit
    _

</llo_original>
